<compile_context>
chip_gen: v7x
topology: tpu7x:2x2x1
jax: 0.10.0
libtpu: 0.0.40
codegen_flags: <defaults>
</compile_context>

<pallas_src>
import functools

import jax
import jax.numpy as jnp
from jax import lax
from jax.experimental import pallas as pl
from jax.experimental.pallas import tpu as pltpu

EPS = 1e-5
_LANE = 128
_SUBLANE = 8
_TARGET_IN_BYTES = 2 * 1024 * 1024   # per-grid-step tile budget (fits all gens)


def _round_up(x, m):
    return (x + m - 1) // m * m


def _fill_columns(x_ref, b, col_ref, *, offsets, l_out, cin_p):
    """Scatter the 9 statically shifted lane-slices of image `b` into the
    (9*Cin_p, l_out) column scratch (sublane-aligned row blocks)."""
    for k, off in enumerate(offsets):
        col_ref[pl.ds(k * cin_p, cin_p), :] = x_ref[b, :, pl.ds(off, l_out)]


def _conv_stats_kernel(x_ref, w_ref, mask_ref, sum_ref, ssq_ref, col_ref, *,
                       offsets, l_out, cin_p, block_b):
    # Pass 1: conv tile via one deep-K matmul per image, per-block partial
    # per-channel sum / sum-of-squares (reduced across blocks in JAX).
    acc_sum = jnp.zeros(sum_ref.shape[1:], jnp.float32)
    acc_ssq = jnp.zeros(ssq_ref.shape[1:], jnp.float32)
    for b in range(block_b):
        _fill_columns(x_ref, b, col_ref, offsets=offsets, l_out=l_out, cin_p=cin_p)
        y = jnp.dot(w_ref[...], col_ref[...], preferred_element_type=jnp.float32)
        ym = y * mask_ref[...]                         # zero out padded lanes
        acc_sum = acc_sum + jnp.sum(ym, axis=1, keepdims=True)
        acc_ssq = acc_ssq + jnp.sum(ym * y, axis=1, keepdims=True)
    sum_ref[0] = acc_sum
    ssq_ref[0] = acc_ssq


def _conv_bn_relu_kernel(x_ref, w_ref, scale_ref, shift_ref, o_ref, col_ref, *,
                         offsets, l_out, cin_p, block_b):
    # Pass 2: recompute the conv tile, apply folded BN affine + ReLU, store a
    # lane-dense (Cout_p, l_out) tile per image (last dim multiple of 128).
    for b in range(block_b):
        _fill_columns(x_ref, b, col_ref, offsets=offsets, l_out=l_out, cin_p=cin_p)
        y = jnp.dot(w_ref[...], col_ref[...], preferred_element_type=jnp.float32)
        o_ref[b] = jnp.maximum(y * scale_ref[...] + shift_ref[...], 0.0).astype(o_ref.dtype)


@functools.partial(jax.jit, static_argnames=("compute_dtype",))
def cnn_select_forward(x_nchw, w_oihw, gamma, beta, *, compute_dtype=jnp.float32):
    """CNN_select forward (kernel_size=3 branch): Conv3x3(s1,p1) -> BN(train) -> ReLU."""
    N, Cin, H, W = x_nchw.shape
    Cout = w_oihw.shape[0]
    KH = KW = 3
    Hp, Wp = H + 2, W + 2

    cin_p = _round_up(Cin, _SUBLANE)                  # sublane-aligned channels
    cout_p = _round_up(Cout, _SUBLANE)

    l_out = _round_up(H * Wp, _LANE)                  # lane extent of all output rows
    max_off = (KH - 1) * Wp + (KW - 1)                # largest tap offset
    l_in = _round_up(max(l_out + max_off, Hp * Wp), _LANE)

    # Batch blocking: largest divisor of N keeping the per-step tile small.
    itemsize = jnp.dtype(compute_dtype).itemsize
    per_image = cin_p * l_in * itemsize + cout_p * l_out * 4
    block_b = max(1, min(N, _TARGET_IN_BYTES // max(per_image, 1)))
    while N % block_b:
        block_b -= 1
    num_blocks = N // block_b

    # Prologue (no transposes): pad channels to cin_p, zero-pad spatially,
    # flatten (Hp, Wp) onto lanes, pad lanes to l_in.
    xp = jnp.pad(x_nchw, ((0, 0), (0, cin_p - Cin), (1, 1), (1, 1)))
    xp = xp.reshape(N, cin_p, Hp * Wp)
    xp = jnp.pad(xp, ((0, 0), (0, 0), (0, l_in - Hp * Wp))).astype(compute_dtype)

    # Weights OIHW -> (Cout_p, 9*Cin_p): row o, column tap*Cin_p + c, tap = ky*3+kx.
    w_t = jnp.transpose(w_oihw, (0, 2, 3, 1)).reshape(Cout, KH * KW, Cin)
    w_t = jnp.pad(w_t, ((0, cout_p - Cout), (0, 0), (0, cin_p - Cin)))
    w2 = w_t.reshape(cout_p, KH * KW * cin_p).astype(compute_dtype)

    offsets = tuple(ky * Wp + kx for ky in range(KH) for kx in range(KW))

    # Lane-validity mask for BN statistics (only real (i<H, j<W) positions count).
    lane = jnp.arange(l_out)
    mask = ((lane < H * Wp) & (lane % Wp < W)).astype(jnp.float32).reshape(1, l_out)

    x_spec = pl.BlockSpec((block_b, cin_p, l_in), lambda g: (g, 0, 0))
    w_spec = pl.BlockSpec((cout_p, KH * KW * cin_p), lambda g: (0, 0))
    mask_spec = pl.BlockSpec((1, l_out), lambda g: (0, 0))
    vec_spec = pl.BlockSpec((cout_p, 1), lambda g: (0, 0))
    stat_spec = pl.BlockSpec((1, cout_p, 1), lambda g: (g, 0, 0))

    col_scratch = pltpu.VMEM((KH * KW * cin_p, l_out), compute_dtype)
    cparams = pltpu.CompilerParams(
        dimension_semantics=("parallel",),
        vmem_limit_bytes=32 * 1024 * 1024)

    # ---- Pass 1: conv + per-block per-channel sum / sum-of-squares ----------
    part_sum, part_ssq = pl.pallas_call(
        functools.partial(_conv_stats_kernel, offsets=offsets, l_out=l_out,
                          cin_p=cin_p, block_b=block_b),
        grid=(num_blocks,),
        in_specs=[x_spec, w_spec, mask_spec],
        out_specs=(stat_spec, stat_spec),
        out_shape=(jax.ShapeDtypeStruct((num_blocks, cout_p, 1), jnp.float32),
                   jax.ShapeDtypeStruct((num_blocks, cout_p, 1), jnp.float32)),
        scratch_shapes=[col_scratch],
        compiler_params=cparams,
    )(xp, w2, mask)

    # Tiny BN fold on (Cout_p, 1) vectors (fused under the single jit).
    count = float(N * H * W)
    ch_sum = jnp.sum(part_sum, axis=0)
    ch_ssq = jnp.sum(part_ssq, axis=0)
    mean = ch_sum / count
    var = ch_ssq / count - mean * mean                # biased variance (train-mode BN)
    inv_std = lax.rsqrt(var + EPS)
    gamma_p = jnp.pad(gamma.astype(jnp.float32), (0, cout_p - Cout), constant_values=1.0)
    beta_p = jnp.pad(beta.astype(jnp.float32), (0, cout_p - Cout))
    scale = gamma_p.reshape(cout_p, 1) * inv_std
    shift = beta_p.reshape(cout_p, 1) - mean * scale

    # ---- Pass 2: conv (recomputed) + BN affine + ReLU, lane-dense output ----
    out_flat = pl.pallas_call(
        functools.partial(_conv_bn_relu_kernel, offsets=offsets, l_out=l_out,
                          cin_p=cin_p, block_b=block_b),
        grid=(num_blocks,),
        in_specs=[x_spec, w_spec, vec_spec, vec_spec],
        out_specs=pl.BlockSpec((block_b, cout_p, l_out), lambda g: (g, 0, 0)),
        out_shape=jax.ShapeDtypeStruct((N, cout_p, l_out), jnp.float32),
        scratch_shapes=[col_scratch],
        compiler_params=cparams,
    )(xp, w2, scale, shift)

    # Epilogue: drop padded channels / lanes / columns; already NCHW-ordered.
    out = out_flat[:, :Cout, :H * Wp].reshape(N, Cout, H, Wp)[:, :, :, :W]
    return out


def reference_forward(x_nchw, w_oihw, gamma, beta):
    """Pure-JAX reference matching PyTorch semantics (correctness check)."""
    y = lax.conv_general_dilated(
        x_nchw, w_oihw, window_strides=(1, 1), padding="SAME",
        dimension_numbers=("NCHW", "OIHW", "NCHW"))
    mean = jnp.mean(y, axis=(0, 2, 3), keepdims=True)
    var = jnp.var(y, axis=(0, 2, 3), keepdims=True)   # biased, like BN training
    y_hat = (y - mean) / jnp.sqrt(var + EPS)
    y_hat = y_hat * gamma.reshape(1, -1, 1, 1) + beta.reshape(1, -1, 1, 1)
    return jnp.maximum(y_hat, 0.0)


if __name__ == "__main__":
    key = jax.random.PRNGKey(0)
    k_x, k_w = jax.random.split(key)

    # Small shapes consistent with the module (NCHW input).
    N, Cin, Cout, H, W = 2, 4, 8, 16, 16
    x = jax.random.normal(k_x, (N, Cin, H, W), dtype=jnp.float32)

    # Deterministic synthetic parameter init (not a checkpoint load).
    w = jax.random.normal(k_w, (Cout, Cin, 3, 3), dtype=jnp.float32) * 0.1
    gamma = jnp.ones((Cout,), dtype=jnp.float32)   # BatchNorm2d default weight
    beta = jnp.zeros((Cout,), dtype=jnp.float32)   # BatchNorm2d default bias

    out = jax.block_until_ready(cnn_select_forward(x, w, gamma, beta))

    ref = reference_forward(x, w, gamma, beta)
    assert out.shape == (N, Cout, H, W)
    max_err = float(jnp.max(jnp.abs(out - ref)))
    assert jnp.allclose(out, ref, atol=1e-3, rtol=1e-3), max_err

    print("KERNEL_OK")
</pallas_src>

<mosaic_0001>
module attributes {stable_mosaic.version = 11 : i64} {
  func.func @_conv_stats_kernel(%arg0: i32, %arg1: memref<2x8x512xf32, #tpu.memory_space<vmem>>, %arg2: memref<8x72xf32, #tpu.memory_space<vmem>>, %arg3: memref<1x384xf32, #tpu.memory_space<vmem>>, %arg4: memref<1x8x1xf32, #tpu.memory_space<vmem>>, %arg5: memref<1x8x1xf32, #tpu.memory_space<vmem>>, %arg6: memref<72x384xf32, #tpu.memory_space<vmem>>) attributes {dimension_semantics = [#tpu.dimension_semantics<parallel>], iteration_bounds = array<i64: 1>, scalar_prefetch = 0 : i64, scratch_operands = 1 : i64, tpu.core_type = #tpu.core_type<tc>, window_params = [{transform_indices = @transform_0, window_bounds = array<i64: 2, 8, 512>}, {pipeline_mode = #tpu.pipeline_mode<synchronous>, transform_indices = @transform_1, window_bounds = array<i64: 8, 72>}, {pipeline_mode = #tpu.pipeline_mode<synchronous>, transform_indices = @transform_2, window_bounds = array<i64: 1, 384>}, {transform_indices = @transform_3, window_bounds = array<i64: 1, 8, 1>}, {transform_indices = @transform_4, window_bounds = array<i64: 1, 8, 1>}]} {
    %cst = arith.constant 0.000000e+00 : f32
    %0 = vector.broadcast %cst : f32 to vector<8x1xf32>
    %cst_0 = arith.constant 0.000000e+00 : f32
    %1 = vector.broadcast %cst_0 : f32 to vector<8x1xf32>
    %c0 = arith.constant 0 : index
    %c0_1 = arith.constant 0 : index
    %c0_2 = arith.constant 0 : index
    %2 = vector.load %arg1[%c0, %c0_1, %c0_2] : memref<2x8x512xf32, #tpu.memory_space<vmem>>, vector<1x8x384xf32>
    %3 = vector.shape_cast %2 : vector<1x8x384xf32> to vector<8x384xf32>
    %c0_3 = arith.constant 0 : index
    %c0_4 = arith.constant 0 : index
    %4 = vector.load %arg6[%c0_3, %c0_4] : memref<72x384xf32, #tpu.memory_space<vmem>>, vector<8x384xf32>
    tpu.vector_store %arg6[%c0_3, %c0_4], %3 {strides = array<i32>} : memref<72x384xf32, #tpu.memory_space<vmem>>, vector<8x384xf32>,
    %c0_5 = arith.constant 0 : index
    %c0_6 = arith.constant 0 : index
    %c1 = arith.constant 1 : index
    %5 = vector.load %arg1[%c0_5, %c0_6, %c1] : memref<2x8x512xf32, #tpu.memory_space<vmem>>, vector<1x8x384xf32>
    %6 = vector.shape_cast %5 : vector<1x8x384xf32> to vector<8x384xf32>
    %c8 = arith.constant 8 : index
    %c0_7 = arith.constant 0 : index
    %7 = vector.load %arg6[%c8, %c0_7] : memref<72x384xf32, #tpu.memory_space<vmem>>, vector<8x384xf32>
    tpu.vector_store %arg6[%c8, %c0_7], %6 {strides = array<i32>} : memref<72x384xf32, #tpu.memory_space<vmem>>, vector<8x384xf32>,
    %c0_8 = arith.constant 0 : index
    %c0_9 = arith.constant 0 : index
    %c2 = arith.constant 2 : index
    %8 = vector.load %arg1[%c0_8, %c0_9, %c2] : memref<2x8x512xf32, #tpu.memory_space<vmem>>, vector<1x8x384xf32>
    %9 = vector.shape_cast %8 : vector<1x8x384xf32> to vector<8x384xf32>
    %c16 = arith.constant 16 : index
    %c0_10 = arith.constant 0 : index
    %10 = vector.load %arg6[%c16, %c0_10] : memref<72x384xf32, #tpu.memory_space<vmem>>, vector<8x384xf32>
    tpu.vector_store %arg6[%c16, %c0_10], %9 {strides = array<i32>} : memref<72x384xf32, #tpu.memory_space<vmem>>, vector<8x384xf32>,
    %c0_11 = arith.constant 0 : index
    %c0_12 = arith.constant 0 : index
    %c18 = arith.constant 18 : index
    %11 = vector.load %arg1[%c0_11, %c0_12, %c18] : memref<2x8x512xf32, #tpu.memory_space<vmem>>, vector<1x8x384xf32>
    %12 = vector.shape_cast %11 : vector<1x8x384xf32> to vector<8x384xf32>
    %c24 = arith.constant 24 : index
    %c0_13 = arith.constant 0 : index
    %13 = vector.load %arg6[%c24, %c0_13] : memref<72x384xf32, #tpu.memory_space<vmem>>, vector<8x384xf32>
    tpu.vector_store %arg6[%c24, %c0_13], %12 {strides = array<i32>} : memref<72x384xf32, #tpu.memory_space<vmem>>, vector<8x384xf32>,
    %c0_14 = arith.constant 0 : index
    %c0_15 = arith.constant 0 : index
    %c19 = arith.constant 19 : index
    %14 = vector.load %arg1[%c0_14, %c0_15, %c19] : memref<2x8x512xf32, #tpu.memory_space<vmem>>, vector<1x8x384xf32>
    %15 = vector.shape_cast %14 : vector<1x8x384xf32> to vector<8x384xf32>
    %c32 = arith.constant 32 : index
    %c0_16 = arith.constant 0 : index
    %16 = vector.load %arg6[%c32, %c0_16] : memref<72x384xf32, #tpu.memory_space<vmem>>, vector<8x384xf32>
    tpu.vector_store %arg6[%c32, %c0_16], %15 {strides = array<i32>} : memref<72x384xf32, #tpu.memory_space<vmem>>, vector<8x384xf32>,
    %c0_17 = arith.constant 0 : index
    %c0_18 = arith.constant 0 : index
    %c20 = arith.constant 20 : index
    %17 = vector.load %arg1[%c0_17, %c0_18, %c20] : memref<2x8x512xf32, #tpu.memory_space<vmem>>, vector<1x8x384xf32>
    %18 = vector.shape_cast %17 : vector<1x8x384xf32> to vector<8x384xf32>
    %c40 = arith.constant 40 : index
    %c0_19 = arith.constant 0 : index
    %19 = vector.load %arg6[%c40, %c0_19] : memref<72x384xf32, #tpu.memory_space<vmem>>, vector<8x384xf32>
    tpu.vector_store %arg6[%c40, %c0_19], %18 {strides = array<i32>} : memref<72x384xf32, #tpu.memory_space<vmem>>, vector<8x384xf32>,
    %c0_20 = arith.constant 0 : index
    %c0_21 = arith.constant 0 : index
    %c36 = arith.constant 36 : index
    %20 = vector.load %arg1[%c0_20, %c0_21, %c36] : memref<2x8x512xf32, #tpu.memory_space<vmem>>, vector<1x8x384xf32>
    %21 = vector.shape_cast %20 : vector<1x8x384xf32> to vector<8x384xf32>
    %c48 = arith.constant 48 : index
    %c0_22 = arith.constant 0 : index
    %22 = vector.load %arg6[%c48, %c0_22] : memref<72x384xf32, #tpu.memory_space<vmem>>, vector<8x384xf32>
    tpu.vector_store %arg6[%c48, %c0_22], %21 {strides = array<i32>} : memref<72x384xf32, #tpu.memory_space<vmem>>, vector<8x384xf32>,
    %c0_23 = arith.constant 0 : index
    %c0_24 = arith.constant 0 : index
    %c37 = arith.constant 37 : index
    %23 = vector.load %arg1[%c0_23, %c0_24, %c37] : memref<2x8x512xf32, #tpu.memory_space<vmem>>, vector<1x8x384xf32>
    %24 = vector.shape_cast %23 : vector<1x8x384xf32> to vector<8x384xf32>
    %c56 = arith.constant 56 : index
    %c0_25 = arith.constant 0 : index
    %25 = vector.load %arg6[%c56, %c0_25] : memref<72x384xf32, #tpu.memory_space<vmem>>, vector<8x384xf32>
    tpu.vector_store %arg6[%c56, %c0_25], %24 {strides = array<i32>} : memref<72x384xf32, #tpu.memory_space<vmem>>, vector<8x384xf32>,
    %c0_26 = arith.constant 0 : index
    %c0_27 = arith.constant 0 : index
    %c38 = arith.constant 38 : index
    %26 = vector.load %arg1[%c0_26, %c0_27, %c38] : memref<2x8x512xf32, #tpu.memory_space<vmem>>, vector<1x8x384xf32>
    %27 = vector.shape_cast %26 : vector<1x8x384xf32> to vector<8x384xf32>
    %c64 = arith.constant 64 : index
    %c0_28 = arith.constant 0 : index
    %28 = vector.load %arg6[%c64, %c0_28] : memref<72x384xf32, #tpu.memory_space<vmem>>, vector<8x384xf32>
    tpu.vector_store %arg6[%c64, %c0_28], %27 {strides = array<i32>} : memref<72x384xf32, #tpu.memory_space<vmem>>, vector<8x384xf32>,
    %c0_29 = arith.constant 0 : index
    %c0_30 = arith.constant 0 : index
    %29 = vector.load %arg2[%c0_29, %c0_30] : memref<8x72xf32, #tpu.memory_space<vmem>>, vector<8x72xf32>
    %c0_31 = arith.constant 0 : index
    %c0_32 = arith.constant 0 : index
    %30 = vector.load %arg6[%c0_31, %c0_32] : memref<72x384xf32, #tpu.memory_space<vmem>>, vector<72x384xf32>
    %cst_33 = arith.constant dense<0.000000e+00> : vector<8x384xf32>
    %31 = tpu.matmul %29, %30, %cst_33 {dimension_numbers = #tpu.dot_dimension_numbers<[1], [0], [0], [1], [0, 0, 1, 1], [], []>} : vector<8x72xf32>, vector<72x384xf32>, vector<8x384xf32> -> vector<8x384xf32>
    %c0_34 = arith.constant 0 : index
    %c0_35 = arith.constant 0 : index
    %32 = vector.load %arg3[%c0_34, %c0_35] : memref<1x384xf32, #tpu.memory_space<vmem>>, vector<1x384xf32>
    %33 = vector.broadcast %32 : vector<1x384xf32> to vector<8x384xf32>
    %34 = arith.mulf %31, %33 : vector<8x384xf32>
    %cst_36 = arith.constant dense<0.000000e+00> : vector<8xf32>
    %35 = vector.multi_reduction <add>, %34, %cst_36 [1] : vector<8x384xf32> to vector<8xf32>
    %36 = vector.shape_cast %35 : vector<8xf32> to vector<8x1xf32>
    %37 = arith.addf %0, %36 : vector<8x1xf32>
    %38 = arith.mulf %34, %31 : vector<8x384xf32>
    %cst_37 = arith.constant dense<0.000000e+00> : vector<8xf32>
    %39 = vector.multi_reduction <add>, %38, %cst_37 [1] : vector<8x384xf32> to vector<8xf32>
    %40 = vector.shape_cast %39 : vector<8xf32> to vector<8x1xf32>
    %41 = arith.addf %1, %40 : vector<8x1xf32>
    %c1_38 = arith.constant 1 : index
    %c0_39 = arith.constant 0 : index
    %c0_40 = arith.constant 0 : index
    %42 = vector.load %arg1[%c1_38, %c0_39, %c0_40] : memref<2x8x512xf32, #tpu.memory_space<vmem>>, vector<1x8x384xf32>
    %43 = vector.shape_cast %42 : vector<1x8x384xf32> to vector<8x384xf32>
    %c0_41 = arith.constant 0 : index
    %c0_42 = arith.constant 0 : index
    %44 = vector.load %arg6[%c0_41, %c0_42] : memref<72x384xf32, #tpu.memory_space<vmem>>, vector<8x384xf32>
    tpu.vector_store %arg6[%c0_41, %c0_42], %43 {strides = array<i32>} : memref<72x384xf32, #tpu.memory_space<vmem>>, vector<8x384xf32>,
    %c1_43 = arith.constant 1 : index
    %c0_44 = arith.constant 0 : index
    %c1_45 = arith.constant 1 : index
    %45 = vector.load %arg1[%c1_43, %c0_44, %c1_45] : memref<2x8x512xf32, #tpu.memory_space<vmem>>, vector<1x8x384xf32>
    %46 = vector.shape_cast %45 : vector<1x8x384xf32> to vector<8x384xf32>
    %c8_46 = arith.constant 8 : index
    %c0_47 = arith.constant 0 : index
    %47 = vector.load %arg6[%c8_46, %c0_47] : memref<72x384xf32, #tpu.memory_space<vmem>>, vector<8x384xf32>
    tpu.vector_store %arg6[%c8_46, %c0_47], %46 {strides = array<i32>} : memref<72x384xf32, #tpu.memory_space<vmem>>, vector<8x384xf32>,
    %c1_48 = arith.constant 1 : index
    %c0_49 = arith.constant 0 : index
    %c2_50 = arith.constant 2 : index
    %48 = vector.load %arg1[%c1_48, %c0_49, %c2_50] : memref<2x8x512xf32, #tpu.memory_space<vmem>>, vector<1x8x384xf32>
    %49 = vector.shape_cast %48 : vector<1x8x384xf32> to vector<8x384xf32>
    %c16_51 = arith.constant 16 : index
    %c0_52 = arith.constant 0 : index
    %50 = vector.load %arg6[%c16_51, %c0_52] : memref<72x384xf32, #tpu.memory_space<vmem>>, vector<8x384xf32>
    tpu.vector_store %arg6[%c16_51, %c0_52], %49 {strides = array<i32>} : memref<72x384xf32, #tpu.memory_space<vmem>>, vector<8x384xf32>,
    %c1_53 = arith.constant 1 : index
    %c0_54 = arith.constant 0 : index
    %c18_55 = arith.constant 18 : index
    %51 = vector.load %arg1[%c1_53, %c0_54, %c18_55] : memref<2x8x512xf32, #tpu.memory_space<vmem>>, vector<1x8x384xf32>
    %52 = vector.shape_cast %51 : vector<1x8x384xf32> to vector<8x384xf32>
    %c24_56 = arith.constant 24 : index
    %c0_57 = arith.constant 0 : index
    %53 = vector.load %arg6[%c24_56, %c0_57] : memref<72x384xf32, #tpu.memory_space<vmem>>, vector<8x384xf32>
    tpu.vector_store %arg6[%c24_56, %c0_57], %52 {strides = array<i32>} : memref<72x384xf32, #tpu.memory_space<vmem>>, vector<8x384xf32>,
    %c1_58 = arith.constant 1 : index
    %c0_59 = arith.constant 0 : index
    %c19_60 = arith.constant 19 : index
    %54 = vector.load %arg1[%c1_58, %c0_59, %c19_60] : memref<2x8x512xf32, #tpu.memory_space<vmem>>, vector<1x8x384xf32>
    %55 = vector.shape_cast %54 : vector<1x8x384xf32> to vector<8x384xf32>
    %c32_61 = arith.constant 32 : index
    %c0_62 = arith.constant 0 : index
    %56 = vector.load %arg6[%c32_61, %c0_62] : memref<72x384xf32, #tpu.memory_space<vmem>>, vector<8x384xf32>
    tpu.vector_store %arg6[%c32_61, %c0_62], %55 {strides = array<i32>} : memref<72x384xf32, #tpu.memory_space<vmem>>, vector<8x384xf32>,
    %c1_63 = arith.constant 1 : index
    %c0_64 = arith.constant 0 : index
    %c20_65 = arith.constant 20 : index
    %57 = vector.load %arg1[%c1_63, %c0_64, %c20_65] : memref<2x8x512xf32, #tpu.memory_space<vmem>>, vector<1x8x384xf32>
    %58 = vector.shape_cast %57 : vector<1x8x384xf32> to vector<8x384xf32>
    %c40_66 = arith.constant 40 : index
    %c0_67 = arith.constant 0 : index
    %59 = vector.load %arg6[%c40_66, %c0_67] : memref<72x384xf32, #tpu.memory_space<vmem>>, vector<8x384xf32>
    tpu.vector_store %arg6[%c40_66, %c0_67], %58 {strides = array<i32>} : memref<72x384xf32, #tpu.memory_space<vmem>>, vector<8x384xf32>,
    %c1_68 = arith.constant 1 : index
    %c0_69 = arith.constant 0 : index
    %c36_70 = arith.constant 36 : index
    %60 = vector.load %arg1[%c1_68, %c0_69, %c36_70] : memref<2x8x512xf32, #tpu.memory_space<vmem>>, vector<1x8x384xf32>
    %61 = vector.shape_cast %60 : vector<1x8x384xf32> to vector<8x384xf32>
    %c48_71 = arith.constant 48 : index
    %c0_72 = arith.constant 0 : index
    %62 = vector.load %arg6[%c48_71, %c0_72] : memref<72x384xf32, #tpu.memory_space<vmem>>, vector<8x384xf32>
    tpu.vector_store %arg6[%c48_71, %c0_72], %61 {strides = array<i32>} : memref<72x384xf32, #tpu.memory_space<vmem>>, vector<8x384xf32>,
    %c1_73 = arith.constant 1 : index
    %c0_74 = arith.constant 0 : index
    %c37_75 = arith.constant 37 : index
    %63 = vector.load %arg1[%c1_73, %c0_74, %c37_75] : memref<2x8x512xf32, #tpu.memory_space<vmem>>, vector<1x8x384xf32>
    %64 = vector.shape_cast %63 : vector<1x8x384xf32> to vector<8x384xf32>
    %c56_76 = arith.constant 56 : index
    %c0_77 = arith.constant 0 : index
    %65 = vector.load %arg6[%c56_76, %c0_77] : memref<72x384xf32, #tpu.memory_space<vmem>>, vector<8x384xf32>
    tpu.vector_store %arg6[%c56_76, %c0_77], %64 {strides = array<i32>} : memref<72x384xf32, #tpu.memory_space<vmem>>, vector<8x384xf32>,
    %c1_78 = arith.constant 1 : index
    %c0_79 = arith.constant 0 : index
    %c38_80 = arith.constant 38 : index
    %66 = vector.load %arg1[%c1_78, %c0_79, %c38_80] : memref<2x8x512xf32, #tpu.memory_space<vmem>>, vector<1x8x384xf32>
    %67 = vector.shape_cast %66 : vector<1x8x384xf32> to vector<8x384xf32>
    %c64_81 = arith.constant 64 : index
    %c0_82 = arith.constant 0 : index
    %68 = vector.load %arg6[%c64_81, %c0_82] : memref<72x384xf32, #tpu.memory_space<vmem>>, vector<8x384xf32>
    tpu.vector_store %arg6[%c64_81, %c0_82], %67 {strides = array<i32>} : memref<72x384xf32, #tpu.memory_space<vmem>>, vector<8x384xf32>,
    %c0_83 = arith.constant 0 : index
    %c0_84 = arith.constant 0 : index
    %69 = vector.load %arg2[%c0_83, %c0_84] : memref<8x72xf32, #tpu.memory_space<vmem>>, vector<8x72xf32>
    %c0_85 = arith.constant 0 : index
    %c0_86 = arith.constant 0 : index
    %70 = vector.load %arg6[%c0_85, %c0_86] : memref<72x384xf32, #tpu.memory_space<vmem>>, vector<72x384xf32>
    %cst_87 = arith.constant dense<0.000000e+00> : vector<8x384xf32>
    %71 = tpu.matmul %69, %70, %cst_87 {dimension_numbers = #tpu.dot_dimension_numbers<[1], [0], [0], [1], [0, 0, 1, 1], [], []>} : vector<8x72xf32>, vector<72x384xf32>, vector<8x384xf32> -> vector<8x384xf32>
    %c0_88 = arith.constant 0 : index
    %c0_89 = arith.constant 0 : index
    %72 = vector.load %arg3[%c0_88, %c0_89] : memref<1x384xf32, #tpu.memory_space<vmem>>, vector<1x384xf32>
    %73 = vector.broadcast %72 : vector<1x384xf32> to vector<8x384xf32>
    %74 = arith.mulf %71, %73 : vector<8x384xf32>
    %cst_90 = arith.constant dense<0.000000e+00> : vector<8xf32>
    %75 = vector.multi_reduction <add>, %74, %cst_90 [1] : vector<8x384xf32> to vector<8xf32>
    %76 = vector.shape_cast %75 : vector<8xf32> to vector<8x1xf32>
    %77 = arith.addf %37, %76 : vector<8x1xf32>
    %78 = arith.mulf %74, %71 : vector<8x384xf32>
    %cst_91 = arith.constant dense<0.000000e+00> : vector<8xf32>
    %79 = vector.multi_reduction <add>, %78, %cst_91 [1] : vector<8x384xf32> to vector<8xf32>
    %80 = vector.shape_cast %79 : vector<8xf32> to vector<8x1xf32>
    %81 = arith.addf %41, %80 : vector<8x1xf32>
    %c0_92 = arith.constant 0 : index
    %c0_93 = arith.constant 0 : index
    %c0_94 = arith.constant 0 : index
    %82 = vector.load %arg4[%c0_92, %c0_93, %c0_94] : memref<1x8x1xf32, #tpu.memory_space<vmem>>, vector<1x8x1xf32>
    %83 = vector.shape_cast %82 : vector<1x8x1xf32> to vector<8x1xf32>
    %84 = vector.shape_cast %77 : vector<8x1xf32> to vector<1x8x1xf32>
    tpu.vector_store %arg4[%c0_92, %c0_93, %c0_94], %84 {strides = array<i32>} : memref<1x8x1xf32, #tpu.memory_space<vmem>>, vector<1x8x1xf32>,
    %c0_95 = arith.constant 0 : index
    %c0_96 = arith.constant 0 : index
    %c0_97 = arith.constant 0 : index
    %85 = vector.load %arg5[%c0_95, %c0_96, %c0_97] : memref<1x8x1xf32, #tpu.memory_space<vmem>>, vector<1x8x1xf32>
    %86 = vector.shape_cast %85 : vector<1x8x1xf32> to vector<8x1xf32>
    %87 = vector.shape_cast %81 : vector<8x1xf32> to vector<1x8x1xf32>
    tpu.vector_store %arg5[%c0_95, %c0_96, %c0_97], %87 {strides = array<i32>} : memref<1x8x1xf32, #tpu.memory_space<vmem>>, vector<1x8x1xf32>,
    return
  }
  func.func @transform_0(%arg0: i32) -> (i32, i32, i32) {
    %c0_i32 = arith.constant 0 : i32
    %c0_i32_0 = arith.constant 0 : i32
    %c0_i32_1 = arith.constant 0 : i32
    return %arg0, %c0_i32, %c0_i32_0 : i32, i32, i32
  }
  func.func @transform_1(%arg0: i32) -> (i32, i32) {
    %c0_i32 = arith.constant 0 : i32
    %c0_i32_0 = arith.constant 0 : i32
    %c0_i32_1 = arith.constant 0 : i32
    return %c0_i32, %c0_i32_0 : i32, i32
  }
  func.func @transform_2(%arg0: i32) -> (i32, i32) {
    %c0_i32 = arith.constant 0 : i32
    %c0_i32_0 = arith.constant 0 : i32
    %c0_i32_1 = arith.constant 0 : i32
    return %c0_i32, %c0_i32_0 : i32, i32
  }
  func.func @transform_3(%arg0: i32) -> (i32, i32, i32) {
    %c0_i32 = arith.constant 0 : i32
    %c0_i32_0 = arith.constant 0 : i32
    %c0_i32_1 = arith.constant 0 : i32
    return %arg0, %c0_i32, %c0_i32_0 : i32, i32, i32
  }
  func.func @transform_4(%arg0: i32) -> (i32, i32, i32) {
    %c0_i32 = arith.constant 0 : i32
    %c0_i32_0 = arith.constant 0 : i32
    %c0_i32_1 = arith.constant 0 : i32
    return %arg0, %c0_i32, %c0_i32_0 : i32, i32, i32
  }
}

module attributes {stable_mosaic.version = 11 : i64} {
  func.func @_conv_bn_relu_kernel(%arg0: i32, %arg1: memref<2x8x512xf32, #tpu.memory_space<vmem>>, %arg2: memref<8x72xf32, #tpu.memory_space<vmem>>, %arg3: memref<8x1xf32, #tpu.memory_space<vmem>>, %arg4: memref<8x1xf32, #tpu.memory_space<vmem>>, %arg5: memref<2x8x384xf32, #tpu.memory_space<vmem>>, %arg6: memref<72x384xf32, #tpu.memory_space<vmem>>) attributes {dimension_semantics = [#tpu.dimension_semantics<parallel>], iteration_bounds = array<i64: 1>, scalar_prefetch = 0 : i64, scratch_operands = 1 : i64, tpu.core_type = #tpu.core_type<tc>, window_params = [{transform_indices = @transform_0, window_bounds = array<i64: 2, 8, 512>}, {pipeline_mode = #tpu.pipeline_mode<synchronous>, transform_indices = @transform_1, window_bounds = array<i64: 8, 72>}, {pipeline_mode = #tpu.pipeline_mode<synchronous>, transform_indices = @transform_2, window_bounds = array<i64: 8, 1>}, {pipeline_mode = #tpu.pipeline_mode<synchronous>, transform_indices = @transform_3, window_bounds = array<i64: 8, 1>}, {transform_indices = @transform_4, window_bounds = array<i64: 2, 8, 384>}]} {
    %c0 = arith.constant 0 : index
    %c0_0 = arith.constant 0 : index
    %c0_1 = arith.constant 0 : index
    %0 = vector.load %arg1[%c0, %c0_0, %c0_1] : memref<2x8x512xf32, #tpu.memory_space<vmem>>, vector<1x8x384xf32>
    %1 = vector.shape_cast %0 : vector<1x8x384xf32> to vector<8x384xf32>
    %c0_2 = arith.constant 0 : index
    %c0_3 = arith.constant 0 : index
    %2 = vector.load %arg6[%c0_2, %c0_3] : memref<72x384xf32, #tpu.memory_space<vmem>>, vector<8x384xf32>
    tpu.vector_store %arg6[%c0_2, %c0_3], %1 {strides = array<i32>} : memref<72x384xf32, #tpu.memory_space<vmem>>, vector<8x384xf32>,
    %c0_4 = arith.constant 0 : index
    %c0_5 = arith.constant 0 : index
    %c1 = arith.constant 1 : index
    %3 = vector.load %arg1[%c0_4, %c0_5, %c1] : memref<2x8x512xf32, #tpu.memory_space<vmem>>, vector<1x8x384xf32>
    %4 = vector.shape_cast %3 : vector<1x8x384xf32> to vector<8x384xf32>
    %c8 = arith.constant 8 : index
    %c0_6 = arith.constant 0 : index
    %5 = vector.load %arg6[%c8, %c0_6] : memref<72x384xf32, #tpu.memory_space<vmem>>, vector<8x384xf32>
    tpu.vector_store %arg6[%c8, %c0_6], %4 {strides = array<i32>} : memref<72x384xf32, #tpu.memory_space<vmem>>, vector<8x384xf32>,
    %c0_7 = arith.constant 0 : index
    %c0_8 = arith.constant 0 : index
    %c2 = arith.constant 2 : index
    %6 = vector.load %arg1[%c0_7, %c0_8, %c2] : memref<2x8x512xf32, #tpu.memory_space<vmem>>, vector<1x8x384xf32>
    %7 = vector.shape_cast %6 : vector<1x8x384xf32> to vector<8x384xf32>
    %c16 = arith.constant 16 : index
    %c0_9 = arith.constant 0 : index
    %8 = vector.load %arg6[%c16, %c0_9] : memref<72x384xf32, #tpu.memory_space<vmem>>, vector<8x384xf32>
    tpu.vector_store %arg6[%c16, %c0_9], %7 {strides = array<i32>} : memref<72x384xf32, #tpu.memory_space<vmem>>, vector<8x384xf32>,
    %c0_10 = arith.constant 0 : index
    %c0_11 = arith.constant 0 : index
    %c18 = arith.constant 18 : index
    %9 = vector.load %arg1[%c0_10, %c0_11, %c18] : memref<2x8x512xf32, #tpu.memory_space<vmem>>, vector<1x8x384xf32>
    %10 = vector.shape_cast %9 : vector<1x8x384xf32> to vector<8x384xf32>
    %c24 = arith.constant 24 : index
    %c0_12 = arith.constant 0 : index
    %11 = vector.load %arg6[%c24, %c0_12] : memref<72x384xf32, #tpu.memory_space<vmem>>, vector<8x384xf32>
    tpu.vector_store %arg6[%c24, %c0_12], %10 {strides = array<i32>} : memref<72x384xf32, #tpu.memory_space<vmem>>, vector<8x384xf32>,
    %c0_13 = arith.constant 0 : index
    %c0_14 = arith.constant 0 : index
    %c19 = arith.constant 19 : index
    %12 = vector.load %arg1[%c0_13, %c0_14, %c19] : memref<2x8x512xf32, #tpu.memory_space<vmem>>, vector<1x8x384xf32>
    %13 = vector.shape_cast %12 : vector<1x8x384xf32> to vector<8x384xf32>
    %c32 = arith.constant 32 : index
    %c0_15 = arith.constant 0 : index
    %14 = vector.load %arg6[%c32, %c0_15] : memref<72x384xf32, #tpu.memory_space<vmem>>, vector<8x384xf32>
    tpu.vector_store %arg6[%c32, %c0_15], %13 {strides = array<i32>} : memref<72x384xf32, #tpu.memory_space<vmem>>, vector<8x384xf32>,
    %c0_16 = arith.constant 0 : index
    %c0_17 = arith.constant 0 : index
    %c20 = arith.constant 20 : index
    %15 = vector.load %arg1[%c0_16, %c0_17, %c20] : memref<2x8x512xf32, #tpu.memory_space<vmem>>, vector<1x8x384xf32>
    %16 = vector.shape_cast %15 : vector<1x8x384xf32> to vector<8x384xf32>
    %c40 = arith.constant 40 : index
    %c0_18 = arith.constant 0 : index
    %17 = vector.load %arg6[%c40, %c0_18] : memref<72x384xf32, #tpu.memory_space<vmem>>, vector<8x384xf32>
    tpu.vector_store %arg6[%c40, %c0_18], %16 {strides = array<i32>} : memref<72x384xf32, #tpu.memory_space<vmem>>, vector<8x384xf32>,
    %c0_19 = arith.constant 0 : index
    %c0_20 = arith.constant 0 : index
    %c36 = arith.constant 36 : index
    %18 = vector.load %arg1[%c0_19, %c0_20, %c36] : memref<2x8x512xf32, #tpu.memory_space<vmem>>, vector<1x8x384xf32>
    %19 = vector.shape_cast %18 : vector<1x8x384xf32> to vector<8x384xf32>
    %c48 = arith.constant 48 : index
    %c0_21 = arith.constant 0 : index
    %20 = vector.load %arg6[%c48, %c0_21] : memref<72x384xf32, #tpu.memory_space<vmem>>, vector<8x384xf32>
    tpu.vector_store %arg6[%c48, %c0_21], %19 {strides = array<i32>} : memref<72x384xf32, #tpu.memory_space<vmem>>, vector<8x384xf32>,
    %c0_22 = arith.constant 0 : index
    %c0_23 = arith.constant 0 : index
    %c37 = arith.constant 37 : index
    %21 = vector.load %arg1[%c0_22, %c0_23, %c37] : memref<2x8x512xf32, #tpu.memory_space<vmem>>, vector<1x8x384xf32>
    %22 = vector.shape_cast %21 : vector<1x8x384xf32> to vector<8x384xf32>
    %c56 = arith.constant 56 : index
    %c0_24 = arith.constant 0 : index
    %23 = vector.load %arg6[%c56, %c0_24] : memref<72x384xf32, #tpu.memory_space<vmem>>, vector<8x384xf32>
    tpu.vector_store %arg6[%c56, %c0_24], %22 {strides = array<i32>} : memref<72x384xf32, #tpu.memory_space<vmem>>, vector<8x384xf32>,
    %c0_25 = arith.constant 0 : index
    %c0_26 = arith.constant 0 : index
    %c38 = arith.constant 38 : index
    %24 = vector.load %arg1[%c0_25, %c0_26, %c38] : memref<2x8x512xf32, #tpu.memory_space<vmem>>, vector<1x8x384xf32>
    %25 = vector.shape_cast %24 : vector<1x8x384xf32> to vector<8x384xf32>
    %c64 = arith.constant 64 : index
    %c0_27 = arith.constant 0 : index
    %26 = vector.load %arg6[%c64, %c0_27] : memref<72x384xf32, #tpu.memory_space<vmem>>, vector<8x384xf32>
    tpu.vector_store %arg6[%c64, %c0_27], %25 {strides = array<i32>} : memref<72x384xf32, #tpu.memory_space<vmem>>, vector<8x384xf32>,
    %c0_28 = arith.constant 0 : index
    %c0_29 = arith.constant 0 : index
    %27 = vector.load %arg2[%c0_28, %c0_29] : memref<8x72xf32, #tpu.memory_space<vmem>>, vector<8x72xf32>
    %c0_30 = arith.constant 0 : index
    %c0_31 = arith.constant 0 : index
    %28 = vector.load %arg6[%c0_30, %c0_31] : memref<72x384xf32, #tpu.memory_space<vmem>>, vector<72x384xf32>
    %cst = arith.constant dense<0.000000e+00> : vector<8x384xf32>
    %29 = tpu.matmul %27, %28, %cst {dimension_numbers = #tpu.dot_dimension_numbers<[1], [0], [0], [1], [0, 0, 1, 1], [], []>} : vector<8x72xf32>, vector<72x384xf32>, vector<8x384xf32> -> vector<8x384xf32>
    %c0_32 = arith.constant 0 : index
    %c0_33 = arith.constant 0 : index
    %30 = vector.load %arg3[%c0_32, %c0_33] : memref<8x1xf32, #tpu.memory_space<vmem>>, vector<8x1xf32>
    %31 = vector.broadcast %30 : vector<8x1xf32> to vector<8x384xf32>
    %32 = arith.mulf %29, %31 : vector<8x384xf32>
    %c0_34 = arith.constant 0 : index
    %c0_35 = arith.constant 0 : index
    %33 = vector.load %arg4[%c0_34, %c0_35] : memref<8x1xf32, #tpu.memory_space<vmem>>, vector<8x1xf32>
    %34 = vector.broadcast %33 : vector<8x1xf32> to vector<8x384xf32>
    %35 = arith.addf %32, %34 : vector<8x384xf32>
    %cst_36 = arith.constant 0.000000e+00 : f32
    %36 = vector.broadcast %cst_36 : f32 to vector<8x384xf32>
    %37 = arith.maximumf %35, %36 : vector<8x384xf32>
    %c0_37 = arith.constant 0 : index
    %c0_38 = arith.constant 0 : index
    %c0_39 = arith.constant 0 : index
    %38 = vector.load %arg5[%c0_37, %c0_38, %c0_39] : memref<2x8x384xf32, #tpu.memory_space<vmem>>, vector<1x8x384xf32>
    %39 = vector.shape_cast %38 : vector<1x8x384xf32> to vector<8x384xf32>
    %40 = vector.shape_cast %37 : vector<8x384xf32> to vector<1x8x384xf32>
    tpu.vector_store %arg5[%c0_37, %c0_38, %c0_39], %40 {strides = array<i32>} : memref<2x8x384xf32, #tpu.memory_space<vmem>>, vector<1x8x384xf32>,
    %c1_40 = arith.constant 1 : index
    %c0_41 = arith.constant 0 : index
    %c0_42 = arith.constant 0 : index
    %41 = vector.load %arg1[%c1_40, %c0_41, %c0_42] : memref<2x8x512xf32, #tpu.memory_space<vmem>>, vector<1x8x384xf32>
    %42 = vector.shape_cast %41 : vector<1x8x384xf32> to vector<8x384xf32>
    %c0_43 = arith.constant 0 : index
    %c0_44 = arith.constant 0 : index
    %43 = vector.load %arg6[%c0_43, %c0_44] : memref<72x384xf32, #tpu.memory_space<vmem>>, vector<8x384xf32>
    tpu.vector_store %arg6[%c0_43, %c0_44], %42 {strides = array<i32>} : memref<72x384xf32, #tpu.memory_space<vmem>>, vector<8x384xf32>,
    %c1_45 = arith.constant 1 : index
    %c0_46 = arith.constant 0 : index
    %c1_47 = arith.constant 1 : index
    %44 = vector.load %arg1[%c1_45, %c0_46, %c1_47] : memref<2x8x512xf32, #tpu.memory_space<vmem>>, vector<1x8x384xf32>
    %45 = vector.shape_cast %44 : vector<1x8x384xf32> to vector<8x384xf32>
    %c8_48 = arith.constant 8 : index
    %c0_49 = arith.constant 0 : index
    %46 = vector.load %arg6[%c8_48, %c0_49] : memref<72x384xf32, #tpu.memory_space<vmem>>, vector<8x384xf32>
    tpu.vector_store %arg6[%c8_48, %c0_49], %45 {strides = array<i32>} : memref<72x384xf32, #tpu.memory_space<vmem>>, vector<8x384xf32>,
    %c1_50 = arith.constant 1 : index
    %c0_51 = arith.constant 0 : index
    %c2_52 = arith.constant 2 : index
    %47 = vector.load %arg1[%c1_50, %c0_51, %c2_52] : memref<2x8x512xf32, #tpu.memory_space<vmem>>, vector<1x8x384xf32>
    %48 = vector.shape_cast %47 : vector<1x8x384xf32> to vector<8x384xf32>
    %c16_53 = arith.constant 16 : index
    %c0_54 = arith.constant 0 : index
    %49 = vector.load %arg6[%c16_53, %c0_54] : memref<72x384xf32, #tpu.memory_space<vmem>>, vector<8x384xf32>
    tpu.vector_store %arg6[%c16_53, %c0_54], %48 {strides = array<i32>} : memref<72x384xf32, #tpu.memory_space<vmem>>, vector<8x384xf32>,
    %c1_55 = arith.constant 1 : index
    %c0_56 = arith.constant 0 : index
    %c18_57 = arith.constant 18 : index
    %50 = vector.load %arg1[%c1_55, %c0_56, %c18_57] : memref<2x8x512xf32, #tpu.memory_space<vmem>>, vector<1x8x384xf32>
    %51 = vector.shape_cast %50 : vector<1x8x384xf32> to vector<8x384xf32>
    %c24_58 = arith.constant 24 : index
    %c0_59 = arith.constant 0 : index
    %52 = vector.load %arg6[%c24_58, %c0_59] : memref<72x384xf32, #tpu.memory_space<vmem>>, vector<8x384xf32>
    tpu.vector_store %arg6[%c24_58, %c0_59], %51 {strides = array<i32>} : memref<72x384xf32, #tpu.memory_space<vmem>>, vector<8x384xf32>,
    %c1_60 = arith.constant 1 : index
    %c0_61 = arith.constant 0 : index
    %c19_62 = arith.constant 19 : index
    %53 = vector.load %arg1[%c1_60, %c0_61, %c19_62] : memref<2x8x512xf32, #tpu.memory_space<vmem>>, vector<1x8x384xf32>
    %54 = vector.shape_cast %53 : vector<1x8x384xf32> to vector<8x384xf32>
    %c32_63 = arith.constant 32 : index
    %c0_64 = arith.constant 0 : index
    %55 = vector.load %arg6[%c32_63, %c0_64] : memref<72x384xf32, #tpu.memory_space<vmem>>, vector<8x384xf32>
    tpu.vector_store %arg6[%c32_63, %c0_64], %54 {strides = array<i32>} : memref<72x384xf32, #tpu.memory_space<vmem>>, vector<8x384xf32>,
    %c1_65 = arith.constant 1 : index
    %c0_66 = arith.constant 0 : index
    %c20_67 = arith.constant 20 : index
    %56 = vector.load %arg1[%c1_65, %c0_66, %c20_67] : memref<2x8x512xf32, #tpu.memory_space<vmem>>, vector<1x8x384xf32>
    %57 = vector.shape_cast %56 : vector<1x8x384xf32> to vector<8x384xf32>
    %c40_68 = arith.constant 40 : index
    %c0_69 = arith.constant 0 : index
    %58 = vector.load %arg6[%c40_68, %c0_69] : memref<72x384xf32, #tpu.memory_space<vmem>>, vector<8x384xf32>
    tpu.vector_store %arg6[%c40_68, %c0_69], %57 {strides = array<i32>} : memref<72x384xf32, #tpu.memory_space<vmem>>, vector<8x384xf32>,
    %c1_70 = arith.constant 1 : index
    %c0_71 = arith.constant 0 : index
    %c36_72 = arith.constant 36 : index
    %59 = vector.load %arg1[%c1_70, %c0_71, %c36_72] : memref<2x8x512xf32, #tpu.memory_space<vmem>>, vector<1x8x384xf32>
    %60 = vector.shape_cast %59 : vector<1x8x384xf32> to vector<8x384xf32>
    %c48_73 = arith.constant 48 : index
    %c0_74 = arith.constant 0 : index
    %61 = vector.load %arg6[%c48_73, %c0_74] : memref<72x384xf32, #tpu.memory_space<vmem>>, vector<8x384xf32>
    tpu.vector_store %arg6[%c48_73, %c0_74], %60 {strides = array<i32>} : memref<72x384xf32, #tpu.memory_space<vmem>>, vector<8x384xf32>,
    %c1_75 = arith.constant 1 : index
    %c0_76 = arith.constant 0 : index
    %c37_77 = arith.constant 37 : index
    %62 = vector.load %arg1[%c1_75, %c0_76, %c37_77] : memref<2x8x512xf32, #tpu.memory_space<vmem>>, vector<1x8x384xf32>
    %63 = vector.shape_cast %62 : vector<1x8x384xf32> to vector<8x384xf32>
    %c56_78 = arith.constant 56 : index
    %c0_79 = arith.constant 0 : index
    %64 = vector.load %arg6[%c56_78, %c0_79] : memref<72x384xf32, #tpu.memory_space<vmem>>, vector<8x384xf32>
    tpu.vector_store %arg6[%c56_78, %c0_79], %63 {strides = array<i32>} : memref<72x384xf32, #tpu.memory_space<vmem>>, vector<8x384xf32>,
    %c1_80 = arith.constant 1 : index
    %c0_81 = arith.constant 0 : index
    %c38_82 = arith.constant 38 : index
    %65 = vector.load %arg1[%c1_80, %c0_81, %c38_82] : memref<2x8x512xf32, #tpu.memory_space<vmem>>, vector<1x8x384xf32>
    %66 = vector.shape_cast %65 : vector<1x8x384xf32> to vector<8x384xf32>
    %c64_83 = arith.constant 64 : index
    %c0_84 = arith.constant 0 : index
    %67 = vector.load %arg6[%c64_83, %c0_84] : memref<72x384xf32, #tpu.memory_space<vmem>>, vector<8x384xf32>
    tpu.vector_store %arg6[%c64_83, %c0_84], %66 {strides = array<i32>} : memref<72x384xf32, #tpu.memory_space<vmem>>, vector<8x384xf32>,
    %c0_85 = arith.constant 0 : index
    %c0_86 = arith.constant 0 : index
    %68 = vector.load %arg2[%c0_85, %c0_86] : memref<8x72xf32, #tpu.memory_space<vmem>>, vector<8x72xf32>
    %c0_87 = arith.constant 0 : index
    %c0_88 = arith.constant 0 : index
    %69 = vector.load %arg6[%c0_87, %c0_88] : memref<72x384xf32, #tpu.memory_space<vmem>>, vector<72x384xf32>
    %cst_89 = arith.constant dense<0.000000e+00> : vector<8x384xf32>
    %70 = tpu.matmul %68, %69, %cst_89 {dimension_numbers = #tpu.dot_dimension_numbers<[1], [0], [0], [1], [0, 0, 1, 1], [], []>} : vector<8x72xf32>, vector<72x384xf32>, vector<8x384xf32> -> vector<8x384xf32>
    %c0_90 = arith.constant 0 : index
    %c0_91 = arith.constant 0 : index
    %71 = vector.load %arg3[%c0_90, %c0_91] : memref<8x1xf32, #tpu.memory_space<vmem>>, vector<8x1xf32>
    %72 = vector.broadcast %71 : vector<8x1xf32> to vector<8x384xf32>
    %73 = arith.mulf %70, %72 : vector<8x384xf32>
    %c0_92 = arith.constant 0 : index
    %c0_93 = arith.constant 0 : index
    %74 = vector.load %arg4[%c0_92, %c0_93] : memref<8x1xf32, #tpu.memory_space<vmem>>, vector<8x1xf32>
    %75 = vector.broadcast %74 : vector<8x1xf32> to vector<8x384xf32>
    %76 = arith.addf %73, %75 : vector<8x384xf32>
    %cst_94 = arith.constant 0.000000e+00 : f32
    %77 = vector.broadcast %cst_94 : f32 to vector<8x384xf32>
    %78 = arith.maximumf %76, %77 : vector<8x384xf32>
    %c1_95 = arith.constant 1 : index
    %c0_96 = arith.constant 0 : index
    %c0_97 = arith.constant 0 : index
    %79 = vector.load %arg5[%c1_95, %c0_96, %c0_97] : memref<2x8x384xf32, #tpu.memory_space<vmem>>, vector<1x8x384xf32>
    %80 = vector.shape_cast %79 : vector<1x8x384xf32> to vector<8x384xf32>
    %81 = vector.shape_cast %78 : vector<8x384xf32> to vector<1x8x384xf32>
    tpu.vector_store %arg5[%c1_95, %c0_96, %c0_97], %81 {strides = array<i32>} : memref<2x8x384xf32, #tpu.memory_space<vmem>>, vector<1x8x384xf32>,
    return
  }
  func.func @transform_0(%arg0: i32) -> (i32, i32, i32) {
    %c0_i32 = arith.constant 0 : i32
    %c0_i32_0 = arith.constant 0 : i32
    %c0_i32_1 = arith.constant 0 : i32
    return %arg0, %c0_i32, %c0_i32_0 : i32, i32, i32
  }
  func.func @transform_1(%arg0: i32) -> (i32, i32) {
    %c0_i32 = arith.constant 0 : i32
    %c0_i32_0 = arith.constant 0 : i32
    %c0_i32_1 = arith.constant 0 : i32
    return %c0_i32, %c0_i32_0 : i32, i32
  }
  func.func @transform_2(%arg0: i32) -> (i32, i32) {
    %c0_i32 = arith.constant 0 : i32
    %c0_i32_0 = arith.constant 0 : i32
    %c0_i32_1 = arith.constant 0 : i32
    return %c0_i32, %c0_i32_0 : i32, i32
  }
  func.func @transform_3(%arg0: i32) -> (i32, i32) {
    %c0_i32 = arith.constant 0 : i32
    %c0_i32_0 = arith.constant 0 : i32
    %c0_i32_1 = arith.constant 0 : i32
    return %c0_i32, %c0_i32_0 : i32, i32
  }
  func.func @transform_4(%arg0: i32) -> (i32, i32, i32) {
    %c0_i32 = arith.constant 0 : i32
    %c0_i32_0 = arith.constant 0 : i32
    %c0_i32_1 = arith.constant 0 : i32
    return %arg0, %c0_i32, %c0_i32_0 : i32, i32, i32
  }
}

</mosaic_0001>

<llo_original>
// kernel: cnn_select_forward.3
$region0: #{cnn_select_forward.3}
  #allocation0 [shape = 'u32[]', space=smem, size = 0x4, offset = 0x4, fixed_abs, tag = 'smem constant byte address 0x4 - core index']
  #allocation1 [shape = 'u32[144,128]{1,0:T(1,128)}', space=vmem, size = 0x12000, scoped, tag = 'internal scratch']
  #allocation2 [shape = 'f32[72,384]{1,0:T(8,128)}', space=vmem, size = 0x1b000, scoped, tag = 'scratch operand']
  %s0 = inlined_call_operand.vmem [shape: f32[2,8,512], index: 0, kind: input, shape index: {}]
  %s1 = inlined_call_operand.vmem [shape: f32[8,72], index: 1, kind: input, shape index: {}]
  %s2 = inlined_call_operand.vmem [shape: f32[8,1], index: 2, kind: input, shape index: {}]
  %s3 = inlined_call_operand.vmem [shape: f32[8,1], index: 3, kind: input, shape index: {}]
  %s4 = inlined_call_operand.vmem [shape: f32[2,8,384], index: 4, kind: output, shape index: {}]
  %s5 = sld [smem:[#allocation0]]
  $region26: #{cnn_select_forward.3} parent=0
    _
  %s7 = ssub.s32 1, %s5
  %s8 = scalar_select 0, %s7, %s5
  // Predicated region
  $region2: #{cnn_select_forward.3} parent=0 // pred_check
    _
  $region3: #{cnn_select_forward.3} parent=0 // pred_check_branch
    %10 = sbr.rel (0) target = $region5
  $region4: #{cnn_select_forward.3} parent=0 // pred_region
    _
  $region5: #{cnn_select_forward.3} parent=0 // pred_fallthru
    _
  // Predicated region
  $region6: #{cnn_select_forward.3} parent=0 // pred_check
    _
  $region7: #{cnn_select_forward.3} parent=0 // pred_check_branch
    %12 = sbr.rel (0) target = $region9
  $region8: #{cnn_select_forward.3} parent=0 // pred_region
    _
  $region9: #{cnn_select_forward.3} parent=0 // pred_fallthru
    _
  // Predicated region
  $region10: #{cnn_select_forward.3} parent=0 // pred_check
    _
  $region11: #{cnn_select_forward.3} parent=0 // pred_check_branch
    %14 = sbr.rel (0) target = $region13
  $region12: #{cnn_select_forward.3} parent=0 // pred_region
    _
  $region13: #{cnn_select_forward.3} parent=0 // pred_fallthru
    _
  // Predicated region
  $region14: #{cnn_select_forward.3} parent=0 // pred_check
    _
  $region15: #{cnn_select_forward.3} parent=0 // pred_check_branch
    %16 = sbr.rel (0) target = $region17
  $region16: #{cnn_select_forward.3} parent=0 // pred_region
    _
  $region17: #{cnn_select_forward.3} parent=0 // pred_fallthru
    _
  %v17 = vld [vmem:[%s0] sm:$0xff]
  %v18 = vld [vmem:[%s0 + $0x8] sm:$0xff]
  %v19 = vld [vmem:[%s0 + $0x10] sm:$0xff]
  %20 = vst [vmem:[#allocation2] sm:$0xff] %v17
  %21 = vst [vmem:[#allocation2 + $0x8] sm:$0xff] %v18
  %22 = vst [vmem:[#allocation2 + $0x10] sm:$0xff] %v19
  %v23 = vld [vmem:[%s0] sm:$0xff]
  %v24 = vld [vmem:[%s0 + $0x8] sm:$0xff]
  %v25 = vld [vmem:[%s0 + $0x10] sm:$0xff]
  %v26 = vld [vmem:[%s0 + $0x18] sm:$0xff]
  %31 = vrot.lane.b32.xlu0 %v23, 127
  %v32 = vpop.permute.xlu0 %31
  %33 = vrot.lane.b32.xlu0 %v24, 127
  %v34 = vpop.permute.xlu0 %33
  %35 = vrot.lane.b32.xlu0 %v25, 127
  %v36 = vpop.permute.xlu0 %35
  %37 = vrot.lane.b32.xlu0 %v26, 127
  %v38 = vpop.permute.xlu0 %37
  %vm39 = vcmask 1039360
  %v40 = vsel %vm39, %v32, %v34
  %v41 = vsel %vm39, %v34, %v36
  %v42 = vsel %vm39, %v36, %v38
  %46 = vst [vmem:[#allocation2 + $0x18] sm:$0xff] %v40
  %47 = vst [vmem:[#allocation2 + $0x20] sm:$0xff] %v41
  %48 = vst [vmem:[#allocation2 + $0x28] sm:$0xff] %v42
  %v49 = vld [vmem:[%s0] sm:$0xff]
  %v50 = vld [vmem:[%s0 + $0x8] sm:$0xff]
  %v51 = vld [vmem:[%s0 + $0x10] sm:$0xff]
  %v52 = vld [vmem:[%s0 + $0x18] sm:$0xff]
  %57 = vrot.lane.b32.xlu0 %v49, 126
  %v58 = vpop.permute.xlu0 %57
  %59 = vrot.lane.b32.xlu0 %v50, 126
  %v60 = vpop.permute.xlu0 %59
  %61 = vrot.lane.b32.xlu0 %v51, 126
  %v62 = vpop.permute.xlu0 %61
  %63 = vrot.lane.b32.xlu0 %v52, 126
  %v64 = vpop.permute.xlu0 %63
  %vm65 = vcmask 1031168
  %v66 = vsel %vm65, %v58, %v60
  %v67 = vsel %vm65, %v60, %v62
  %v68 = vsel %vm65, %v62, %v64
  %72 = vst [vmem:[#allocation2 + $0x30] sm:$0xff] %v66
  %73 = vst [vmem:[#allocation2 + $0x38] sm:$0xff] %v67
  %74 = vst [vmem:[#allocation2 + $0x40] sm:$0xff] %v68
  %v75 = vld [vmem:[%s0] sm:$0xff]
  %v76 = vld [vmem:[%s0 + $0x8] sm:$0xff]
  %v77 = vld [vmem:[%s0 + $0x10] sm:$0xff]
  %v78 = vld [vmem:[%s0 + $0x18] sm:$0xff]
  %83 = vrot.lane.b32.xlu0 %v75, 110
  %v84 = vpop.permute.xlu0 %83
  %85 = vrot.lane.b32.xlu0 %v76, 110
  %v86 = vpop.permute.xlu0 %85
  %87 = vrot.lane.b32.xlu0 %v77, 110
  %v88 = vpop.permute.xlu0 %87
  %89 = vrot.lane.b32.xlu0 %v78, 110
  %v90 = vpop.permute.xlu0 %89
  %vm91 = vcmask 900096
  %v92 = vsel %vm91, %v84, %v86
  %v93 = vsel %vm91, %v86, %v88
  %v94 = vsel %vm91, %v88, %v90
  %98 = vst [vmem:[#allocation2 + $0x48] sm:$0xff] %v92
  %99 = vst [vmem:[#allocation2 + $0x50] sm:$0xff] %v93
  %100 = vst [vmem:[#allocation2 + $0x58] sm:$0xff] %v94
  %v101 = vld [vmem:[%s0] sm:$0xff]
  %v102 = vld [vmem:[%s0 + $0x8] sm:$0xff]
  %v103 = vld [vmem:[%s0 + $0x10] sm:$0xff]
  %v104 = vld [vmem:[%s0 + $0x18] sm:$0xff]
  %109 = vrot.lane.b32.xlu0 %v101, 109
  %v110 = vpop.permute.xlu0 %109
  %111 = vrot.lane.b32.xlu0 %v102, 109
  %v112 = vpop.permute.xlu0 %111
  %113 = vrot.lane.b32.xlu0 %v103, 109
  %v114 = vpop.permute.xlu0 %113
  %115 = vrot.lane.b32.xlu0 %v104, 109
  %v116 = vpop.permute.xlu0 %115
  %vm117 = vcmask 891904
  %v118 = vsel %vm117, %v110, %v112
  %v119 = vsel %vm117, %v112, %v114
  %v120 = vsel %vm117, %v114, %v116
  %124 = vst [vmem:[#allocation2 + $0x60] sm:$0xff] %v118
  %125 = vst [vmem:[#allocation2 + $0x68] sm:$0xff] %v119
  %126 = vst [vmem:[#allocation2 + $0x70] sm:$0xff] %v120
  %v127 = vld [vmem:[%s0] sm:$0xff]
  %v128 = vld [vmem:[%s0 + $0x8] sm:$0xff]
  %v129 = vld [vmem:[%s0 + $0x10] sm:$0xff]
  %v130 = vld [vmem:[%s0 + $0x18] sm:$0xff]
  %135 = vrot.lane.b32.xlu0 %v127, 108
  %v136 = vpop.permute.xlu0 %135
  %137 = vrot.lane.b32.xlu0 %v128, 108
  %v138 = vpop.permute.xlu0 %137
  %139 = vrot.lane.b32.xlu0 %v129, 108
  %v140 = vpop.permute.xlu0 %139
  %141 = vrot.lane.b32.xlu0 %v130, 108
  %v142 = vpop.permute.xlu0 %141
  %vm143 = vcmask 883712
  %v144 = vsel %vm143, %v136, %v138
  %v145 = vsel %vm143, %v138, %v140
  %v146 = vsel %vm143, %v140, %v142
  %150 = vst [vmem:[#allocation2 + $0x78] sm:$0xff] %v144
  %151 = vst [vmem:[#allocation2 + $0x80] sm:$0xff] %v145
  %152 = vst [vmem:[#allocation2 + $0x88] sm:$0xff] %v146
  %v153 = vld [vmem:[%s0] sm:$0xff]
  %v154 = vld [vmem:[%s0 + $0x8] sm:$0xff]
  %v155 = vld [vmem:[%s0 + $0x10] sm:$0xff]
  %v156 = vld [vmem:[%s0 + $0x18] sm:$0xff]
  %161 = vrot.lane.b32.xlu0 %v153, 92
  %v162 = vpop.permute.xlu0 %161
  %163 = vrot.lane.b32.xlu0 %v154, 92
  %v164 = vpop.permute.xlu0 %163
  %165 = vrot.lane.b32.xlu0 %v155, 92
  %v166 = vpop.permute.xlu0 %165
  %167 = vrot.lane.b32.xlu0 %v156, 92
  %v168 = vpop.permute.xlu0 %167
  %vm169 = vcmask 752640
  %v170 = vsel %vm169, %v162, %v164
  %v171 = vsel %vm169, %v164, %v166
  %v172 = vsel %vm169, %v166, %v168
  %176 = vst [vmem:[#allocation2 + $0x90] sm:$0xff] %v170
  %177 = vst [vmem:[#allocation2 + $0x98] sm:$0xff] %v171
  %178 = vst [vmem:[#allocation2 + $0xa0] sm:$0xff] %v172
  %v179 = vld [vmem:[%s0] sm:$0xff]
  %v180 = vld [vmem:[%s0 + $0x8] sm:$0xff]
  %v181 = vld [vmem:[%s0 + $0x10] sm:$0xff]
  %v182 = vld [vmem:[%s0 + $0x18] sm:$0xff]
  %187 = vrot.lane.b32.xlu0 %v179, 91
  %v188 = vpop.permute.xlu0 %187
  %189 = vrot.lane.b32.xlu0 %v180, 91
  %v190 = vpop.permute.xlu0 %189
  %191 = vrot.lane.b32.xlu0 %v181, 91
  %v192 = vpop.permute.xlu0 %191
  %193 = vrot.lane.b32.xlu0 %v182, 91
  %v194 = vpop.permute.xlu0 %193
  %vm195 = vcmask 744448
  %v196 = vsel %vm195, %v188, %v190
  %v197 = vsel %vm195, %v190, %v192
  %v198 = vsel %vm195, %v192, %v194
  %202 = vst [vmem:[#allocation2 + $0xa8] sm:$0xff] %v196
  %203 = vst [vmem:[#allocation2 + $0xb0] sm:$0xff] %v197
  %204 = vst [vmem:[#allocation2 + $0xb8] sm:$0xff] %v198
  %v205 = vld [vmem:[%s0] sm:$0xff]
  %v206 = vld [vmem:[%s0 + $0x8] sm:$0xff]
  %v207 = vld [vmem:[%s0 + $0x10] sm:$0xff]
  %v208 = vld [vmem:[%s0 + $0x18] sm:$0xff]
  %213 = vrot.lane.b32.xlu0 %v205, 90
  %v214 = vpop.permute.xlu0 %213
  %215 = vrot.lane.b32.xlu0 %v206, 90
  %v216 = vpop.permute.xlu0 %215
  %217 = vrot.lane.b32.xlu0 %v207, 90
  %v218 = vpop.permute.xlu0 %217
  %219 = vrot.lane.b32.xlu0 %v208, 90
  %v220 = vpop.permute.xlu0 %219
  %vm221 = vcmask 736256
  %v222 = vsel %vm221, %v214, %v216
  %v223 = vsel %vm221, %v216, %v218
  %v224 = vsel %vm221, %v218, %v220
  %228 = vst [vmem:[#allocation2 + $0xc0] sm:$0xff] %v222
  %229 = vst [vmem:[#allocation2 + $0xc8] sm:$0xff] %v223
  %230 = vst [vmem:[#allocation2 + $0xd0] sm:$0xff] %v224
  %v231 = vld [vmem:[%s1] sm:$0xff]
  %v232 = vld [vmem:[#allocation2] sm:$0xff]
  %v233 = vld [vmem:[#allocation2 + $0x8] sm:$0xff]
  %v234 = vld [vmem:[#allocation2 + $0x10] sm:$0xff]
  %v235 = vld [vmem:[#allocation2 + $0x18] sm:$0xff]
  %v236 = vld [vmem:[#allocation2 + $0x20] sm:$0xff]
  %v237 = vld [vmem:[#allocation2 + $0x28] sm:$0xff]
  %v238 = vld [vmem:[#allocation2 + $0x30] sm:$0xff]
  %v239 = vld [vmem:[#allocation2 + $0x38] sm:$0xff]
  %v240 = vld [vmem:[#allocation2 + $0x40] sm:$0xff]
  %v241 = vld [vmem:[#allocation2 + $0x48] sm:$0xff]
  %v242 = vld [vmem:[#allocation2 + $0x50] sm:$0xff]
  %v243 = vld [vmem:[#allocation2 + $0x58] sm:$0xff]
  %v244 = vld [vmem:[#allocation2 + $0x60] sm:$0xff]
  %v245 = vld [vmem:[#allocation2 + $0x68] sm:$0xff]
  %v246 = vld [vmem:[#allocation2 + $0x70] sm:$0xff]
  %v247 = vld [vmem:[#allocation2 + $0x78] sm:$0xff]
  %v248 = vld [vmem:[#allocation2 + $0x80] sm:$0xff]
  %v249 = vld [vmem:[#allocation2 + $0x88] sm:$0xff]
  %v250 = vld [vmem:[#allocation2 + $0x90] sm:$0xff]
  %v251 = vld [vmem:[#allocation2 + $0x98] sm:$0xff]
  %v252 = vld [vmem:[#allocation2 + $0xa0] sm:$0xff]
  %v253 = vld [vmem:[#allocation2 + $0xa8] sm:$0xff]
  %v254 = vld [vmem:[#allocation2 + $0xb0] sm:$0xff]
  %v255 = vld [vmem:[#allocation2 + $0xb8] sm:$0xff]
  %v256 = vld [vmem:[#allocation2 + $0xc0] sm:$0xff]
  %v257 = vld [vmem:[#allocation2 + $0xc8] sm:$0xff]
  %v258 = vld [vmem:[#allocation2 + $0xd0] sm:$0xff]
  %vm259 = vcmask 588800
  %v261 = vsel %vm259, %v231, 0
  %263 = vmatprep.subr.mxu0 %v233
  %264 = vmatpush1.msra.mxu0 %v232
  %265 = vmatprep.subr.mxu0 %v236
  %266 = vmatpush1.msra.mxu0 %v235
  %267 = vmatprep.subr.mxu0 %v239
  %268 = vmatpush1.msra.mxu0 %v238
  %269 = vmatprep.subr.mxu0 %v242
  %270 = vmatpush1.msra.mxu0 %v241
  %271 = vmatprep.subr.mxu0 %v245
  %272 = vmatpush1.msra.mxu0 %v244
  %273 = vmatprep.subr.mxu0 %v248
  %274 = vmatpush1.msra.mxu0 %v247
  %275 = vmatprep.subr.mxu0 %v251
  %276 = vmatpush1.msra.mxu0 %v250
  %277 = vmatprep.subr.mxu0 %v254
  %278 = vmatpush1.msra.mxu0 %v253
  %279 = vmatprep.subr.mxu0 %v257
  %280 = vmatpush1.msra.mxu0 %v256
  %281 = vmatprep.subr.mxu0 0.0
  %282 = vmatpush1.msra.mxu0 0.0
  %283 = vmatprep.subr.mxu0 0.0
  %284 = vmatpush1.msra.mxu0 0.0
  %285 = vmatprep.subr.mxu0 0.0
  %286 = vmatpush1.msra.mxu0 0.0
  %287 = vmatprep.subr.mxu0 0.0
  %288 = vmatpush1.msra.mxu0 0.0
  %289 = vmatprep.subr.mxu0 0.0
  %290 = vmatpush1.msra.mxu0 0.0
  %291 = vmatprep.subr.mxu0 0.0
  %292 = vmatpush1.msra.mxu0 0.0
  %293 = vmatprep.subr.mxu0 0.0
  %294 = vmatpush1.msra.mxu0 0.0
  %295 = vmatprep.subr.mxu0 0.0
  %296 = vmatpush1.msra.mxu0 0.0
  %297 = vmatprep.subr.mxu0 0.0
  %298 = vmatpush1.msra.mxu0 0.0
  %299 = vmatprep.subr.mxu0 0.0
  %300 = vmatpush1.msra.mxu0 0.0
  %301 = vmatprep.subr.mxu0 0.0
  %302 = vmatpush1.msra.mxu0 0.0
  %303 = vmatprep.subr.mxu0 0.0
  %304 = vmatpush1.msra.mxu0 0.0
  %305 = vmatprep.subr.mxu0 0.0
  %306 = vmatpush1.msra.mxu0 0.0
  %307 = vmatprep.subr.mxu0 0.0
  %308 = vmatpush1.msra.mxu0 0.0
  %309 = vmatprep.subr.mxu0 0.0
  %310 = vmatpush1.msra.mxu0 0.0
  %311 = vmatprep.subr.mxu0 0.0
  %312 = vmatpush1.msra.mxu0 0.0
  %313 = vmatprep.subr.mxu0 0.0
  %314 = vmatpush1.msra.mxu0 0.0
  %315 = vmatprep.subr.mxu0 0.0
  %316 = vmatpush1.msra.mxu0 0.0
  %317 = vmatprep.subr.mxu0 0.0
  %318 = vmatpush1.msra.mxu0 0.0
  %319 = vmatprep.subr.mxu0 0.0
  %320 = vmatpush1.msra.mxu0 0.0
  %321 = vmatprep.subr.mxu0 0.0
  %322 = vmatpush1.msra.mxu0 0.0
  %323 = vmatprep.subr.mxu0 0.0
  %324 = vmatpush1.msra.mxu0 0.0
  %325 = vmatprep.subr.mxu0 0.0
  %326 = vmatpush1.msra.mxu0 0.0
  %327 = vmatprep.mubr.f32.mxu0 0.0
  %328 = vmatmul.mubr.f32.gmra.mrb[0].mxu0 %v261
  %v329 = vpop.f32.mrb[0].mxu0
  %v330 = vadd.f32 0.0, %v329
  %v331 = vpop.f32.mrb[0].mxu0
  %v332 = vadd.f32 0.0, %v331
  %333 = vdwg.mxu0
  %334 = vmatprep.subr.mxu0 0.0
  %335 = vmatpush1.msra.mxu0 %v234
  %336 = vmatprep.subr.mxu0 0.0
  %337 = vmatpush1.msra.mxu0 %v237
  %338 = vmatprep.subr.mxu0 0.0
  %339 = vmatpush1.msra.mxu0 %v240
  %340 = vmatprep.subr.mxu0 0.0
  %341 = vmatpush1.msra.mxu0 %v243
  %342 = vmatprep.subr.mxu0 0.0
  %343 = vmatpush1.msra.mxu0 %v246
  %344 = vmatprep.subr.mxu0 0.0
  %345 = vmatpush1.msra.mxu0 %v249
  %346 = vmatprep.subr.mxu0 0.0
  %347 = vmatpush1.msra.mxu0 %v252
  %348 = vmatprep.subr.mxu0 0.0
  %349 = vmatpush1.msra.mxu0 %v255
  %350 = vmatprep.subr.mxu0 0.0
  %351 = vmatpush1.msra.mxu0 %v258
  %352 = vmatprep.subr.mxu0 0.0
  %353 = vmatpush1.msra.mxu0 0.0
  %354 = vmatprep.subr.mxu0 0.0
  %355 = vmatpush1.msra.mxu0 0.0
  %356 = vmatprep.subr.mxu0 0.0
  %357 = vmatpush1.msra.mxu0 0.0
  %358 = vmatprep.subr.mxu0 0.0
  %359 = vmatpush1.msra.mxu0 0.0
  %360 = vmatprep.subr.mxu0 0.0
  %361 = vmatpush1.msra.mxu0 0.0
  %362 = vmatprep.subr.mxu0 0.0
  %363 = vmatpush1.msra.mxu0 0.0
  %364 = vmatprep.subr.mxu0 0.0
  %365 = vmatpush1.msra.mxu0 0.0
  %366 = vmatprep.subr.mxu0 0.0
  %367 = vmatpush1.msra.mxu0 0.0
  %368 = vmatprep.subr.mxu0 0.0
  %369 = vmatpush1.msra.mxu0 0.0
  %370 = vmatprep.subr.mxu0 0.0
  %371 = vmatpush1.msra.mxu0 0.0
  %372 = vmatprep.subr.mxu0 0.0
  %373 = vmatpush1.msra.mxu0 0.0
  %374 = vmatprep.subr.mxu0 0.0
  %375 = vmatpush1.msra.mxu0 0.0
  %376 = vmatprep.subr.mxu0 0.0
  %377 = vmatpush1.msra.mxu0 0.0
  %378 = vmatprep.subr.mxu0 0.0
  %379 = vmatpush1.msra.mxu0 0.0
  %380 = vmatprep.subr.mxu0 0.0
  %381 = vmatpush1.msra.mxu0 0.0
  %382 = vmatprep.subr.mxu0 0.0
  %383 = vmatpush1.msra.mxu0 0.0
  %384 = vmatprep.subr.mxu0 0.0
  %385 = vmatpush1.msra.mxu0 0.0
  %386 = vmatprep.subr.mxu0 0.0
  %387 = vmatpush1.msra.mxu0 0.0
  %388 = vmatprep.subr.mxu0 0.0
  %389 = vmatpush1.msra.mxu0 0.0
  %390 = vmatprep.subr.mxu0 0.0
  %391 = vmatpush1.msra.mxu0 0.0
  %392 = vmatprep.subr.mxu0 0.0
  %393 = vmatpush1.msra.mxu0 0.0
  %394 = vmatprep.subr.mxu0 0.0
  %395 = vmatpush1.msra.mxu0 0.0
  %396 = vmatprep.subr.mxu0 0.0
  %397 = vmatpush1.msra.mxu0 0.0
  %398 = vmatprep.mubr.f32.mxu0 0.0
  %399 = vmatmul.mubr.f32.gmra.mrb[0].mxu0 %v261
  %v400 = vpop.f32.mrb[0].mxu0
  %v401 = vadd.f32 0.0, %v400
  %v402 = vpop.f32.mrb[0].mxu0
  %403 = vdwg.mxu0
  %v404 = vld [vmem:[%s2] sm:$0xff]
  %406 = vset.pattern.permute.xlu0 0
  %407 = vperm.xlu0 %406, %v404
  %v408 = vpop.permute.xlu0 %407
  %v410 = vmul.f32 %v330, %v408
  %v411 = vmul.f32 %v332, %v408
  %v412 = vmul.f32 %v401, %v408
  %v413 = vld [vmem:[%s3] sm:$0xff]
  %415 = vset.pattern.permute.xlu0 0
  %416 = vperm.xlu0 %415, %v413
  %v417 = vpop.permute.xlu0 %416
  %v419 = vadd.f32 %v410, %v417
  %v420 = vadd.f32 %v411, %v417
  %v421 = vadd.f32 %v412, %v417
  %v422 = vmax.f32 %v419, 0.0
  %v423 = vmax.f32 %v420, 0.0
  %v424 = vmax.f32 %v421, 0.0
  %425 = vst [vmem:[%s4] sm:$0xff] %v422
  %426 = vst [vmem:[%s4 + $0x8] sm:$0xff] %v423
  %427 = vst [vmem:[%s4 + $0x10] sm:$0xff] %v424
  %s428 = scalar_lea.vmem %s0, 32
  %v429 = vld [vmem:[%s428] sm:$0xff]
  %v430 = vld [vmem:[%s428 + $0x8] sm:$0xff]
  %v431 = vld [vmem:[%s428 + $0x10] sm:$0xff]
  %432 = vst [vmem:[#allocation2] sm:$0xff] %v429
  %433 = vst [vmem:[#allocation2 + $0x8] sm:$0xff] %v430
  %434 = vst [vmem:[#allocation2 + $0x10] sm:$0xff] %v431
  %v435 = vld [vmem:[%s428] sm:$0xff]
  %v436 = vld [vmem:[%s428 + $0x8] sm:$0xff]
  %v437 = vld [vmem:[%s428 + $0x10] sm:$0xff]
  %v438 = vld [vmem:[%s428 + $0x18] sm:$0xff]
  %443 = vrot.lane.b32.xlu0 %v435, 127
  %v444 = vpop.permute.xlu0 %443
  %445 = vrot.lane.b32.xlu0 %v436, 127
  %v446 = vpop.permute.xlu0 %445
  %447 = vrot.lane.b32.xlu0 %v437, 127
  %v448 = vpop.permute.xlu0 %447
  %449 = vrot.lane.b32.xlu0 %v438, 127
  %v450 = vpop.permute.xlu0 %449
  %v451 = vsel %vm39, %v444, %v446
  %v452 = vsel %vm39, %v446, %v448
  %v453 = vsel %vm39, %v448, %v450
  %457 = vst [vmem:[#allocation2 + $0x18] sm:$0xff] %v451
  %458 = vst [vmem:[#allocation2 + $0x20] sm:$0xff] %v452
  %459 = vst [vmem:[#allocation2 + $0x28] sm:$0xff] %v453
  %v460 = vld [vmem:[%s428] sm:$0xff]
  %v461 = vld [vmem:[%s428 + $0x8] sm:$0xff]
  %v462 = vld [vmem:[%s428 + $0x10] sm:$0xff]
  %v463 = vld [vmem:[%s428 + $0x18] sm:$0xff]
  %468 = vrot.lane.b32.xlu0 %v460, 126
  %v469 = vpop.permute.xlu0 %468
  %470 = vrot.lane.b32.xlu0 %v461, 126
  %v471 = vpop.permute.xlu0 %470
  %472 = vrot.lane.b32.xlu0 %v462, 126
  %v473 = vpop.permute.xlu0 %472
  %474 = vrot.lane.b32.xlu0 %v463, 126
  %v475 = vpop.permute.xlu0 %474
  %v476 = vsel %vm65, %v469, %v471
  %v477 = vsel %vm65, %v471, %v473
  %v478 = vsel %vm65, %v473, %v475
  %482 = vst [vmem:[#allocation2 + $0x30] sm:$0xff] %v476
  %483 = vst [vmem:[#allocation2 + $0x38] sm:$0xff] %v477
  %484 = vst [vmem:[#allocation2 + $0x40] sm:$0xff] %v478
  %v485 = vld [vmem:[%s428] sm:$0xff]
  %v486 = vld [vmem:[%s428 + $0x8] sm:$0xff]
  %v487 = vld [vmem:[%s428 + $0x10] sm:$0xff]
  %v488 = vld [vmem:[%s428 + $0x18] sm:$0xff]
  %493 = vrot.lane.b32.xlu0 %v485, 110
  %v494 = vpop.permute.xlu0 %493
  %495 = vrot.lane.b32.xlu0 %v486, 110
  %v496 = vpop.permute.xlu0 %495
  %497 = vrot.lane.b32.xlu0 %v487, 110
  %v498 = vpop.permute.xlu0 %497
  %499 = vrot.lane.b32.xlu0 %v488, 110
  %v500 = vpop.permute.xlu0 %499
  %v501 = vsel %vm91, %v494, %v496
  %v502 = vsel %vm91, %v496, %v498
  %v503 = vsel %vm91, %v498, %v500
  %507 = vst [vmem:[#allocation2 + $0x48] sm:$0xff] %v501
  %508 = vst [vmem:[#allocation2 + $0x50] sm:$0xff] %v502
  %509 = vst [vmem:[#allocation2 + $0x58] sm:$0xff] %v503
  %v510 = vld [vmem:[%s428] sm:$0xff]
  %v511 = vld [vmem:[%s428 + $0x8] sm:$0xff]
  %v512 = vld [vmem:[%s428 + $0x10] sm:$0xff]
  %v513 = vld [vmem:[%s428 + $0x18] sm:$0xff]
  %518 = vrot.lane.b32.xlu0 %v510, 109
  %v519 = vpop.permute.xlu0 %518
  %520 = vrot.lane.b32.xlu0 %v511, 109
  %v521 = vpop.permute.xlu0 %520
  %522 = vrot.lane.b32.xlu0 %v512, 109
  %v523 = vpop.permute.xlu0 %522
  %524 = vrot.lane.b32.xlu0 %v513, 109
  %v525 = vpop.permute.xlu0 %524
  %v526 = vsel %vm117, %v519, %v521
  %v527 = vsel %vm117, %v521, %v523
  %v528 = vsel %vm117, %v523, %v525
  %532 = vst [vmem:[#allocation2 + $0x60] sm:$0xff] %v526
  %533 = vst [vmem:[#allocation2 + $0x68] sm:$0xff] %v527
  %534 = vst [vmem:[#allocation2 + $0x70] sm:$0xff] %v528
  %v535 = vld [vmem:[%s428] sm:$0xff]
  %v536 = vld [vmem:[%s428 + $0x8] sm:$0xff]
  %v537 = vld [vmem:[%s428 + $0x10] sm:$0xff]
  %v538 = vld [vmem:[%s428 + $0x18] sm:$0xff]
  %543 = vrot.lane.b32.xlu0 %v535, 108
  %v544 = vpop.permute.xlu0 %543
  %545 = vrot.lane.b32.xlu0 %v536, 108
  %v546 = vpop.permute.xlu0 %545
  %547 = vrot.lane.b32.xlu0 %v537, 108
  %v548 = vpop.permute.xlu0 %547
  %549 = vrot.lane.b32.xlu0 %v538, 108
  %v550 = vpop.permute.xlu0 %549
  %v551 = vsel %vm143, %v544, %v546
  %v552 = vsel %vm143, %v546, %v548
  %v553 = vsel %vm143, %v548, %v550
  %557 = vst [vmem:[#allocation2 + $0x78] sm:$0xff] %v551
  %558 = vst [vmem:[#allocation2 + $0x80] sm:$0xff] %v552
  %559 = vst [vmem:[#allocation2 + $0x88] sm:$0xff] %v553
  %v560 = vld [vmem:[%s428] sm:$0xff]
  %v561 = vld [vmem:[%s428 + $0x8] sm:$0xff]
  %v562 = vld [vmem:[%s428 + $0x10] sm:$0xff]
  %v563 = vld [vmem:[%s428 + $0x18] sm:$0xff]
  %568 = vrot.lane.b32.xlu0 %v560, 92
  %v569 = vpop.permute.xlu0 %568
  %570 = vrot.lane.b32.xlu0 %v561, 92
  %v571 = vpop.permute.xlu0 %570
  %572 = vrot.lane.b32.xlu0 %v562, 92
  %v573 = vpop.permute.xlu0 %572
  %574 = vrot.lane.b32.xlu0 %v563, 92
  %v575 = vpop.permute.xlu0 %574
  %v576 = vsel %vm169, %v569, %v571
  %v577 = vsel %vm169, %v571, %v573
  %v578 = vsel %vm169, %v573, %v575
  %582 = vst [vmem:[#allocation2 + $0x90] sm:$0xff] %v576
  %583 = vst [vmem:[#allocation2 + $0x98] sm:$0xff] %v577
  %584 = vst [vmem:[#allocation2 + $0xa0] sm:$0xff] %v578
  %v585 = vld [vmem:[%s428] sm:$0xff]
  %v586 = vld [vmem:[%s428 + $0x8] sm:$0xff]
  %v587 = vld [vmem:[%s428 + $0x10] sm:$0xff]
  %v588 = vld [vmem:[%s428 + $0x18] sm:$0xff]
  %593 = vrot.lane.b32.xlu0 %v585, 91
  %v594 = vpop.permute.xlu0 %593
  %595 = vrot.lane.b32.xlu0 %v586, 91
  %v596 = vpop.permute.xlu0 %595
  %597 = vrot.lane.b32.xlu0 %v587, 91
  %v598 = vpop.permute.xlu0 %597
  %599 = vrot.lane.b32.xlu0 %v588, 91
  %v600 = vpop.permute.xlu0 %599
  %v601 = vsel %vm195, %v594, %v596
  %v602 = vsel %vm195, %v596, %v598
  %v603 = vsel %vm195, %v598, %v600
  %607 = vst [vmem:[#allocation2 + $0xa8] sm:$0xff] %v601
  %608 = vst [vmem:[#allocation2 + $0xb0] sm:$0xff] %v602
  %609 = vst [vmem:[#allocation2 + $0xb8] sm:$0xff] %v603
  %v610 = vld [vmem:[%s428] sm:$0xff]
  %v611 = vld [vmem:[%s428 + $0x8] sm:$0xff]
  %v612 = vld [vmem:[%s428 + $0x10] sm:$0xff]
  %v613 = vld [vmem:[%s428 + $0x18] sm:$0xff]
  %618 = vrot.lane.b32.xlu0 %v610, 90
  %v619 = vpop.permute.xlu0 %618
  %620 = vrot.lane.b32.xlu0 %v611, 90
  %v621 = vpop.permute.xlu0 %620
  %622 = vrot.lane.b32.xlu0 %v612, 90
  %v623 = vpop.permute.xlu0 %622
  %624 = vrot.lane.b32.xlu0 %v613, 90
  %v625 = vpop.permute.xlu0 %624
  %v626 = vsel %vm221, %v619, %v621
  %v627 = vsel %vm221, %v621, %v623
  %v628 = vsel %vm221, %v623, %v625
  %632 = vst [vmem:[#allocation2 + $0xc0] sm:$0xff] %v626
  %633 = vst [vmem:[#allocation2 + $0xc8] sm:$0xff] %v627
  %634 = vst [vmem:[#allocation2 + $0xd0] sm:$0xff] %v628
  %v635 = vld [vmem:[%s1] sm:$0xff]
  %v636 = vld [vmem:[#allocation2] sm:$0xff]
  %v637 = vld [vmem:[#allocation2 + $0x8] sm:$0xff]
  %v638 = vld [vmem:[#allocation2 + $0x10] sm:$0xff]
  %v639 = vld [vmem:[#allocation2 + $0x18] sm:$0xff]
  %v640 = vld [vmem:[#allocation2 + $0x20] sm:$0xff]
  %v641 = vld [vmem:[#allocation2 + $0x28] sm:$0xff]
  %v642 = vld [vmem:[#allocation2 + $0x30] sm:$0xff]
  %v643 = vld [vmem:[#allocation2 + $0x38] sm:$0xff]
  %v644 = vld [vmem:[#allocation2 + $0x40] sm:$0xff]
  %v645 = vld [vmem:[#allocation2 + $0x48] sm:$0xff]
  %v646 = vld [vmem:[#allocation2 + $0x50] sm:$0xff]
  %v647 = vld [vmem:[#allocation2 + $0x58] sm:$0xff]
  %v648 = vld [vmem:[#allocation2 + $0x60] sm:$0xff]
  %v649 = vld [vmem:[#allocation2 + $0x68] sm:$0xff]
  %v650 = vld [vmem:[#allocation2 + $0x70] sm:$0xff]
  %v651 = vld [vmem:[#allocation2 + $0x78] sm:$0xff]
  %v652 = vld [vmem:[#allocation2 + $0x80] sm:$0xff]
  %v653 = vld [vmem:[#allocation2 + $0x88] sm:$0xff]
  %v654 = vld [vmem:[#allocation2 + $0x90] sm:$0xff]
  %v655 = vld [vmem:[#allocation2 + $0x98] sm:$0xff]
  %v656 = vld [vmem:[#allocation2 + $0xa0] sm:$0xff]
  %v657 = vld [vmem:[#allocation2 + $0xa8] sm:$0xff]
  %v658 = vld [vmem:[#allocation2 + $0xb0] sm:$0xff]
  %v659 = vld [vmem:[#allocation2 + $0xb8] sm:$0xff]
  %v660 = vld [vmem:[#allocation2 + $0xc0] sm:$0xff]
  %v661 = vld [vmem:[#allocation2 + $0xc8] sm:$0xff]
  %v662 = vld [vmem:[#allocation2 + $0xd0] sm:$0xff]
  %v664 = vsel %vm259, %v635, 0
  %666 = vmatprep.subr.mxu0 %v637
  %667 = vmatpush1.msra.mxu0 %v636
  %668 = vmatprep.subr.mxu0 %v640
  %669 = vmatpush1.msra.mxu0 %v639
  %670 = vmatprep.subr.mxu0 %v643
  %671 = vmatpush1.msra.mxu0 %v642
  %672 = vmatprep.subr.mxu0 %v646
  %673 = vmatpush1.msra.mxu0 %v645
  %674 = vmatprep.subr.mxu0 %v649
  %675 = vmatpush1.msra.mxu0 %v648
  %676 = vmatprep.subr.mxu0 %v652
  %677 = vmatpush1.msra.mxu0 %v651
  %678 = vmatprep.subr.mxu0 %v655
  %679 = vmatpush1.msra.mxu0 %v654
  %680 = vmatprep.subr.mxu0 %v658
  %681 = vmatpush1.msra.mxu0 %v657
  %682 = vmatprep.subr.mxu0 %v661
  %683 = vmatpush1.msra.mxu0 %v660
  %684 = vmatprep.subr.mxu0 0.0
  %685 = vmatpush1.msra.mxu0 0.0
  %686 = vmatprep.subr.mxu0 0.0
  %687 = vmatpush1.msra.mxu0 0.0
  %688 = vmatprep.subr.mxu0 0.0
  %689 = vmatpush1.msra.mxu0 0.0
  %690 = vmatprep.subr.mxu0 0.0
  %691 = vmatpush1.msra.mxu0 0.0
  %692 = vmatprep.subr.mxu0 0.0
  %693 = vmatpush1.msra.mxu0 0.0
  %694 = vmatprep.subr.mxu0 0.0
  %695 = vmatpush1.msra.mxu0 0.0
  %696 = vmatprep.subr.mxu0 0.0
  %697 = vmatpush1.msra.mxu0 0.0
  %698 = vmatprep.subr.mxu0 0.0
  %699 = vmatpush1.msra.mxu0 0.0
  %700 = vmatprep.subr.mxu0 0.0
  %701 = vmatpush1.msra.mxu0 0.0
  %702 = vmatprep.subr.mxu0 0.0
  %703 = vmatpush1.msra.mxu0 0.0
  %704 = vmatprep.subr.mxu0 0.0
  %705 = vmatpush1.msra.mxu0 0.0
  %706 = vmatprep.subr.mxu0 0.0
  %707 = vmatpush1.msra.mxu0 0.0
  %708 = vmatprep.subr.mxu0 0.0
  %709 = vmatpush1.msra.mxu0 0.0
  %710 = vmatprep.subr.mxu0 0.0
  %711 = vmatpush1.msra.mxu0 0.0
  %712 = vmatprep.subr.mxu0 0.0
  %713 = vmatpush1.msra.mxu0 0.0
  %714 = vmatprep.subr.mxu0 0.0
  %715 = vmatpush1.msra.mxu0 0.0
  %716 = vmatprep.subr.mxu0 0.0
  %717 = vmatpush1.msra.mxu0 0.0
  %718 = vmatprep.subr.mxu0 0.0
  %719 = vmatpush1.msra.mxu0 0.0
  %720 = vmatprep.subr.mxu0 0.0
  %721 = vmatpush1.msra.mxu0 0.0
  %722 = vmatprep.subr.mxu0 0.0
  %723 = vmatpush1.msra.mxu0 0.0
  %724 = vmatprep.subr.mxu0 0.0
  %725 = vmatpush1.msra.mxu0 0.0
  %726 = vmatprep.subr.mxu0 0.0
  %727 = vmatpush1.msra.mxu0 0.0
  %728 = vmatprep.subr.mxu0 0.0
  %729 = vmatpush1.msra.mxu0 0.0
  %730 = vmatprep.mubr.f32.mxu0 0.0
  %731 = vmatmul.mubr.f32.gmra.mrb[0].mxu0 %v664
  %v732 = vpop.f32.mrb[0].mxu0
  %v733 = vadd.f32 0.0, %v732
  %v734 = vpop.f32.mrb[0].mxu0
  %v735 = vadd.f32 0.0, %v734
  %736 = vdwg.mxu0
  %737 = vmatprep.subr.mxu0 0.0
  %738 = vmatpush1.msra.mxu0 %v638
  %739 = vmatprep.subr.mxu0 0.0
  %740 = vmatpush1.msra.mxu0 %v641
  %741 = vmatprep.subr.mxu0 0.0
  %742 = vmatpush1.msra.mxu0 %v644
  %743 = vmatprep.subr.mxu0 0.0
  %744 = vmatpush1.msra.mxu0 %v647
  %745 = vmatprep.subr.mxu0 0.0
  %746 = vmatpush1.msra.mxu0 %v650
  %747 = vmatprep.subr.mxu0 0.0
  %748 = vmatpush1.msra.mxu0 %v653
  %749 = vmatprep.subr.mxu0 0.0
  %750 = vmatpush1.msra.mxu0 %v656
  %751 = vmatprep.subr.mxu0 0.0
  %752 = vmatpush1.msra.mxu0 %v659
  %753 = vmatprep.subr.mxu0 0.0
  %754 = vmatpush1.msra.mxu0 %v662
  %755 = vmatprep.subr.mxu0 0.0
  %756 = vmatpush1.msra.mxu0 0.0
  %757 = vmatprep.subr.mxu0 0.0
  %758 = vmatpush1.msra.mxu0 0.0
  %759 = vmatprep.subr.mxu0 0.0
  %760 = vmatpush1.msra.mxu0 0.0
  %761 = vmatprep.subr.mxu0 0.0
  %762 = vmatpush1.msra.mxu0 0.0
  %763 = vmatprep.subr.mxu0 0.0
  %764 = vmatpush1.msra.mxu0 0.0
  %765 = vmatprep.subr.mxu0 0.0
  %766 = vmatpush1.msra.mxu0 0.0
  %767 = vmatprep.subr.mxu0 0.0
  %768 = vmatpush1.msra.mxu0 0.0
  %769 = vmatprep.subr.mxu0 0.0
  %770 = vmatpush1.msra.mxu0 0.0
  %771 = vmatprep.subr.mxu0 0.0
  %772 = vmatpush1.msra.mxu0 0.0
  %773 = vmatprep.subr.mxu0 0.0
  %774 = vmatpush1.msra.mxu0 0.0
  %775 = vmatprep.subr.mxu0 0.0
  %776 = vmatpush1.msra.mxu0 0.0
  %777 = vmatprep.subr.mxu0 0.0
  %778 = vmatpush1.msra.mxu0 0.0
  %779 = vmatprep.subr.mxu0 0.0
  %780 = vmatpush1.msra.mxu0 0.0
  %781 = vmatprep.subr.mxu0 0.0
  %782 = vmatpush1.msra.mxu0 0.0
  %783 = vmatprep.subr.mxu0 0.0
  %784 = vmatpush1.msra.mxu0 0.0
  %785 = vmatprep.subr.mxu0 0.0
  %786 = vmatpush1.msra.mxu0 0.0
  %787 = vmatprep.subr.mxu0 0.0
  %788 = vmatpush1.msra.mxu0 0.0
  %789 = vmatprep.subr.mxu0 0.0
  %790 = vmatpush1.msra.mxu0 0.0
  %791 = vmatprep.subr.mxu0 0.0
  %792 = vmatpush1.msra.mxu0 0.0
  %793 = vmatprep.subr.mxu0 0.0
  %794 = vmatpush1.msra.mxu0 0.0
  %795 = vmatprep.subr.mxu0 0.0
  %796 = vmatpush1.msra.mxu0 0.0
  %797 = vmatprep.subr.mxu0 0.0
  %798 = vmatpush1.msra.mxu0 0.0
  %799 = vmatprep.subr.mxu0 0.0
  %800 = vmatpush1.msra.mxu0 0.0
  %801 = vmatprep.mubr.f32.mxu0 0.0
  %802 = vmatmul.mubr.f32.gmra.mrb[0].mxu0 %v664
  %v803 = vpop.f32.mrb[0].mxu0
  %v804 = vadd.f32 0.0, %v803
  %v805 = vpop.f32.mrb[0].mxu0
  %806 = vdwg.mxu0
  %v807 = vld [vmem:[%s2] sm:$0xff]
  %809 = vset.pattern.permute.xlu0 0
  %810 = vperm.xlu0 %809, %v807
  %v811 = vpop.permute.xlu0 %810
  %v813 = vmul.f32 %v733, %v811
  %v814 = vmul.f32 %v735, %v811
  %v815 = vmul.f32 %v804, %v811
  %v816 = vld [vmem:[%s3] sm:$0xff]
  %818 = vset.pattern.permute.xlu0 0
  %819 = vperm.xlu0 %818, %v816
  %v820 = vpop.permute.xlu0 %819
  %v822 = vadd.f32 %v813, %v820
  %v823 = vadd.f32 %v814, %v820
  %v824 = vadd.f32 %v815, %v820
  %v825 = vmax.f32 %v822, 0.0
  %v826 = vmax.f32 %v823, 0.0
  %v827 = vmax.f32 %v824, 0.0
  %s828 = scalar_lea.vmem %s4, 24
  %829 = vst [vmem:[%s828] sm:$0xff] %v825
  %830 = vst [vmem:[%s828 + $0x8] sm:$0xff] %v826
  %831 = vst [vmem:[%s828 + $0x10] sm:$0xff] %v827
  // Predicated region
  $region18: #{cnn_select_forward.3} parent=0 // pred_check
    _
  $region19: #{cnn_select_forward.3} parent=0 // pred_check_branch
    %833 = sbr.rel (0) target = $region21
  $region20: #{cnn_select_forward.3} parent=0 // pred_region
    _
  $region21: #{cnn_select_forward.3} parent=0 // pred_fallthru
    _
  // Predicated region
  $region22: #{cnn_select_forward.3} parent=0 // pred_check
    _
  $region23: #{cnn_select_forward.3} parent=0 // pred_check_branch
    %835 = sbr.rel (0) target = $region25
  $region24: #{cnn_select_forward.3} parent=0 // pred_region
    _
  $region25: #{cnn_select_forward.3} parent=0 // pred_fallthru
    _

// kernel: cnn_select_forward.2
$region0: #{cnn_select_forward.2}
  #allocation0 [shape = 'u32[]', space=smem, size = 0x4, offset = 0x4, fixed_abs, tag = 'smem constant byte address 0x4 - core index']
  #allocation1 [shape = 'u32[144,128]{1,0:T(1,128)}', space=vmem, size = 0x12000, scoped, tag = 'internal scratch']
  #allocation2 [shape = 'f32[72,384]{1,0:T(8,128)}', space=vmem, size = 0x1b000, scoped, tag = 'scratch operand']
  %s0 = inlined_call_operand.vmem [shape: f32[2,8,512], index: 0, kind: input, shape index: {}]
  %s1 = inlined_call_operand.vmem [shape: f32[8,72], index: 1, kind: input, shape index: {}]
  %s2 = inlined_call_operand.vmem [shape: f32[1,384], index: 2, kind: input, shape index: {}]
  %s3 = inlined_call_operand.vmem [shape: f32[1,8,1], index: 3, kind: output, shape index: {0}]
  %s4 = inlined_call_operand.vmem [shape: f32[1,8,1], index: 4, kind: output, shape index: {1}]
  %5 = xla_tuple %s3, %s4
  %s6 = sld [smem:[#allocation0]]
  $region30: #{cnn_select_forward.2} parent=0
    _
  %s8 = ssub.s32 1, %s6
  %s9 = scalar_select 0, %s8, %s6
  // Predicated region
  $region2: #{cnn_select_forward.2} parent=0 // pred_check
    _
  $region3: #{cnn_select_forward.2} parent=0 // pred_check_branch
    %11 = sbr.rel (0) target = $region5
  $region4: #{cnn_select_forward.2} parent=0 // pred_region
    _
  $region5: #{cnn_select_forward.2} parent=0 // pred_fallthru
    _
  // Predicated region
  $region6: #{cnn_select_forward.2} parent=0 // pred_check
    _
  $region7: #{cnn_select_forward.2} parent=0 // pred_check_branch
    %13 = sbr.rel (0) target = $region9
  $region8: #{cnn_select_forward.2} parent=0 // pred_region
    _
  $region9: #{cnn_select_forward.2} parent=0 // pred_fallthru
    _
  // Predicated region
  $region10: #{cnn_select_forward.2} parent=0 // pred_check
    _
  $region11: #{cnn_select_forward.2} parent=0 // pred_check_branch
    %15 = sbr.rel (0) target = $region13
  $region12: #{cnn_select_forward.2} parent=0 // pred_region
    _
  $region13: #{cnn_select_forward.2} parent=0 // pred_fallthru
    _
  %v16 = vld [vmem:[%s0] sm:$0xff]
  %v17 = vld [vmem:[%s0 + $0x8] sm:$0xff]
  %v18 = vld [vmem:[%s0 + $0x10] sm:$0xff]
  %19 = vst [vmem:[#allocation2] sm:$0xff] %v16
  %20 = vst [vmem:[#allocation2 + $0x8] sm:$0xff] %v17
  %21 = vst [vmem:[#allocation2 + $0x10] sm:$0xff] %v18
  %v22 = vld [vmem:[%s0] sm:$0xff]
  %v23 = vld [vmem:[%s0 + $0x8] sm:$0xff]
  %v24 = vld [vmem:[%s0 + $0x10] sm:$0xff]
  %v25 = vld [vmem:[%s0 + $0x18] sm:$0xff]
  %30 = vrot.lane.b32.xlu0 %v22, 127
  %v31 = vpop.permute.xlu0 %30
  %32 = vrot.lane.b32.xlu0 %v23, 127
  %v33 = vpop.permute.xlu0 %32
  %34 = vrot.lane.b32.xlu0 %v24, 127
  %v35 = vpop.permute.xlu0 %34
  %36 = vrot.lane.b32.xlu0 %v25, 127
  %v37 = vpop.permute.xlu0 %36
  %vm38 = vcmask 1039360
  %v39 = vsel %vm38, %v31, %v33
  %v40 = vsel %vm38, %v33, %v35
  %v41 = vsel %vm38, %v35, %v37
  %45 = vst [vmem:[#allocation2 + $0x18] sm:$0xff] %v39
  %46 = vst [vmem:[#allocation2 + $0x20] sm:$0xff] %v40
  %47 = vst [vmem:[#allocation2 + $0x28] sm:$0xff] %v41
  %v48 = vld [vmem:[%s0] sm:$0xff]
  %v49 = vld [vmem:[%s0 + $0x8] sm:$0xff]
  %v50 = vld [vmem:[%s0 + $0x10] sm:$0xff]
  %v51 = vld [vmem:[%s0 + $0x18] sm:$0xff]
  %56 = vrot.lane.b32.xlu0 %v48, 126
  %v57 = vpop.permute.xlu0 %56
  %58 = vrot.lane.b32.xlu0 %v49, 126
  %v59 = vpop.permute.xlu0 %58
  %60 = vrot.lane.b32.xlu0 %v50, 126
  %v61 = vpop.permute.xlu0 %60
  %62 = vrot.lane.b32.xlu0 %v51, 126
  %v63 = vpop.permute.xlu0 %62
  %vm64 = vcmask 1031168
  %v65 = vsel %vm64, %v57, %v59
  %v66 = vsel %vm64, %v59, %v61
  %v67 = vsel %vm64, %v61, %v63
  %71 = vst [vmem:[#allocation2 + $0x30] sm:$0xff] %v65
  %72 = vst [vmem:[#allocation2 + $0x38] sm:$0xff] %v66
  %73 = vst [vmem:[#allocation2 + $0x40] sm:$0xff] %v67
  %v74 = vld [vmem:[%s0] sm:$0xff]
  %v75 = vld [vmem:[%s0 + $0x8] sm:$0xff]
  %v76 = vld [vmem:[%s0 + $0x10] sm:$0xff]
  %v77 = vld [vmem:[%s0 + $0x18] sm:$0xff]
  %82 = vrot.lane.b32.xlu0 %v74, 110
  %v83 = vpop.permute.xlu0 %82
  %84 = vrot.lane.b32.xlu0 %v75, 110
  %v85 = vpop.permute.xlu0 %84
  %86 = vrot.lane.b32.xlu0 %v76, 110
  %v87 = vpop.permute.xlu0 %86
  %88 = vrot.lane.b32.xlu0 %v77, 110
  %v89 = vpop.permute.xlu0 %88
  %vm90 = vcmask 900096
  %v91 = vsel %vm90, %v83, %v85
  %v92 = vsel %vm90, %v85, %v87
  %v93 = vsel %vm90, %v87, %v89
  %97 = vst [vmem:[#allocation2 + $0x48] sm:$0xff] %v91
  %98 = vst [vmem:[#allocation2 + $0x50] sm:$0xff] %v92
  %99 = vst [vmem:[#allocation2 + $0x58] sm:$0xff] %v93
  %v100 = vld [vmem:[%s0] sm:$0xff]
  %v101 = vld [vmem:[%s0 + $0x8] sm:$0xff]
  %v102 = vld [vmem:[%s0 + $0x10] sm:$0xff]
  %v103 = vld [vmem:[%s0 + $0x18] sm:$0xff]
  %108 = vrot.lane.b32.xlu0 %v100, 109
  %v109 = vpop.permute.xlu0 %108
  %110 = vrot.lane.b32.xlu0 %v101, 109
  %v111 = vpop.permute.xlu0 %110
  %112 = vrot.lane.b32.xlu0 %v102, 109
  %v113 = vpop.permute.xlu0 %112
  %114 = vrot.lane.b32.xlu0 %v103, 109
  %v115 = vpop.permute.xlu0 %114
  %vm116 = vcmask 891904
  %v117 = vsel %vm116, %v109, %v111
  %v118 = vsel %vm116, %v111, %v113
  %v119 = vsel %vm116, %v113, %v115
  %123 = vst [vmem:[#allocation2 + $0x60] sm:$0xff] %v117
  %124 = vst [vmem:[#allocation2 + $0x68] sm:$0xff] %v118
  %125 = vst [vmem:[#allocation2 + $0x70] sm:$0xff] %v119
  %v126 = vld [vmem:[%s0] sm:$0xff]
  %v127 = vld [vmem:[%s0 + $0x8] sm:$0xff]
  %v128 = vld [vmem:[%s0 + $0x10] sm:$0xff]
  %v129 = vld [vmem:[%s0 + $0x18] sm:$0xff]
  %134 = vrot.lane.b32.xlu0 %v126, 108
  %v135 = vpop.permute.xlu0 %134
  %136 = vrot.lane.b32.xlu0 %v127, 108
  %v137 = vpop.permute.xlu0 %136
  %138 = vrot.lane.b32.xlu0 %v128, 108
  %v139 = vpop.permute.xlu0 %138
  %140 = vrot.lane.b32.xlu0 %v129, 108
  %v141 = vpop.permute.xlu0 %140
  %vm142 = vcmask 883712
  %v143 = vsel %vm142, %v135, %v137
  %v144 = vsel %vm142, %v137, %v139
  %v145 = vsel %vm142, %v139, %v141
  %149 = vst [vmem:[#allocation2 + $0x78] sm:$0xff] %v143
  %150 = vst [vmem:[#allocation2 + $0x80] sm:$0xff] %v144
  %151 = vst [vmem:[#allocation2 + $0x88] sm:$0xff] %v145
  %v152 = vld [vmem:[%s0] sm:$0xff]
  %v153 = vld [vmem:[%s0 + $0x8] sm:$0xff]
  %v154 = vld [vmem:[%s0 + $0x10] sm:$0xff]
  %v155 = vld [vmem:[%s0 + $0x18] sm:$0xff]
  %160 = vrot.lane.b32.xlu0 %v152, 92
  %v161 = vpop.permute.xlu0 %160
  %162 = vrot.lane.b32.xlu0 %v153, 92
  %v163 = vpop.permute.xlu0 %162
  %164 = vrot.lane.b32.xlu0 %v154, 92
  %v165 = vpop.permute.xlu0 %164
  %166 = vrot.lane.b32.xlu0 %v155, 92
  %v167 = vpop.permute.xlu0 %166
  %vm168 = vcmask 752640
  %v169 = vsel %vm168, %v161, %v163
  %v170 = vsel %vm168, %v163, %v165
  %v171 = vsel %vm168, %v165, %v167
  %175 = vst [vmem:[#allocation2 + $0x90] sm:$0xff] %v169
  %176 = vst [vmem:[#allocation2 + $0x98] sm:$0xff] %v170
  %177 = vst [vmem:[#allocation2 + $0xa0] sm:$0xff] %v171
  %v178 = vld [vmem:[%s0] sm:$0xff]
  %v179 = vld [vmem:[%s0 + $0x8] sm:$0xff]
  %v180 = vld [vmem:[%s0 + $0x10] sm:$0xff]
  %v181 = vld [vmem:[%s0 + $0x18] sm:$0xff]
  %186 = vrot.lane.b32.xlu0 %v178, 91
  %v187 = vpop.permute.xlu0 %186
  %188 = vrot.lane.b32.xlu0 %v179, 91
  %v189 = vpop.permute.xlu0 %188
  %190 = vrot.lane.b32.xlu0 %v180, 91
  %v191 = vpop.permute.xlu0 %190
  %192 = vrot.lane.b32.xlu0 %v181, 91
  %v193 = vpop.permute.xlu0 %192
  %vm194 = vcmask 744448
  %v195 = vsel %vm194, %v187, %v189
  %v196 = vsel %vm194, %v189, %v191
  %v197 = vsel %vm194, %v191, %v193
  %201 = vst [vmem:[#allocation2 + $0xa8] sm:$0xff] %v195
  %202 = vst [vmem:[#allocation2 + $0xb0] sm:$0xff] %v196
  %203 = vst [vmem:[#allocation2 + $0xb8] sm:$0xff] %v197
  %v204 = vld [vmem:[%s0] sm:$0xff]
  %v205 = vld [vmem:[%s0 + $0x8] sm:$0xff]
  %v206 = vld [vmem:[%s0 + $0x10] sm:$0xff]
  %v207 = vld [vmem:[%s0 + $0x18] sm:$0xff]
  %212 = vrot.lane.b32.xlu0 %v204, 90
  %v213 = vpop.permute.xlu0 %212
  %214 = vrot.lane.b32.xlu0 %v205, 90
  %v215 = vpop.permute.xlu0 %214
  %216 = vrot.lane.b32.xlu0 %v206, 90
  %v217 = vpop.permute.xlu0 %216
  %218 = vrot.lane.b32.xlu0 %v207, 90
  %v219 = vpop.permute.xlu0 %218
  %vm220 = vcmask 736256
  %v221 = vsel %vm220, %v213, %v215
  %v222 = vsel %vm220, %v215, %v217
  %v223 = vsel %vm220, %v217, %v219
  %227 = vst [vmem:[#allocation2 + $0xc0] sm:$0xff] %v221
  %228 = vst [vmem:[#allocation2 + $0xc8] sm:$0xff] %v222
  %229 = vst [vmem:[#allocation2 + $0xd0] sm:$0xff] %v223
  %v230 = vld [vmem:[%s1] sm:$0xff]
  %v231 = vld [vmem:[#allocation2] sm:$0xff]
  %v232 = vld [vmem:[#allocation2 + $0x8] sm:$0xff]
  %v233 = vld [vmem:[#allocation2 + $0x10] sm:$0xff]
  %v234 = vld [vmem:[#allocation2 + $0x18] sm:$0xff]
  %v235 = vld [vmem:[#allocation2 + $0x20] sm:$0xff]
  %v236 = vld [vmem:[#allocation2 + $0x28] sm:$0xff]
  %v237 = vld [vmem:[#allocation2 + $0x30] sm:$0xff]
  %v238 = vld [vmem:[#allocation2 + $0x38] sm:$0xff]
  %v239 = vld [vmem:[#allocation2 + $0x40] sm:$0xff]
  %v240 = vld [vmem:[#allocation2 + $0x48] sm:$0xff]
  %v241 = vld [vmem:[#allocation2 + $0x50] sm:$0xff]
  %v242 = vld [vmem:[#allocation2 + $0x58] sm:$0xff]
  %v243 = vld [vmem:[#allocation2 + $0x60] sm:$0xff]
  %v244 = vld [vmem:[#allocation2 + $0x68] sm:$0xff]
  %v245 = vld [vmem:[#allocation2 + $0x70] sm:$0xff]
  %v246 = vld [vmem:[#allocation2 + $0x78] sm:$0xff]
  %v247 = vld [vmem:[#allocation2 + $0x80] sm:$0xff]
  %v248 = vld [vmem:[#allocation2 + $0x88] sm:$0xff]
  %v249 = vld [vmem:[#allocation2 + $0x90] sm:$0xff]
  %v250 = vld [vmem:[#allocation2 + $0x98] sm:$0xff]
  %v251 = vld [vmem:[#allocation2 + $0xa0] sm:$0xff]
  %v252 = vld [vmem:[#allocation2 + $0xa8] sm:$0xff]
  %v253 = vld [vmem:[#allocation2 + $0xb0] sm:$0xff]
  %v254 = vld [vmem:[#allocation2 + $0xb8] sm:$0xff]
  %v255 = vld [vmem:[#allocation2 + $0xc0] sm:$0xff]
  %v256 = vld [vmem:[#allocation2 + $0xc8] sm:$0xff]
  %v257 = vld [vmem:[#allocation2 + $0xd0] sm:$0xff]
  %vm258 = vcmask 588800
  %v260 = vsel %vm258, %v230, 0
  %262 = vmatprep.subr.mxu0 %v232
  %263 = vmatpush1.msra.mxu0 %v231
  %264 = vmatprep.subr.mxu0 %v235
  %265 = vmatpush1.msra.mxu0 %v234
  %266 = vmatprep.subr.mxu0 %v238
  %267 = vmatpush1.msra.mxu0 %v237
  %268 = vmatprep.subr.mxu0 %v241
  %269 = vmatpush1.msra.mxu0 %v240
  %270 = vmatprep.subr.mxu0 %v244
  %271 = vmatpush1.msra.mxu0 %v243
  %272 = vmatprep.subr.mxu0 %v247
  %273 = vmatpush1.msra.mxu0 %v246
  %274 = vmatprep.subr.mxu0 %v250
  %275 = vmatpush1.msra.mxu0 %v249
  %276 = vmatprep.subr.mxu0 %v253
  %277 = vmatpush1.msra.mxu0 %v252
  %278 = vmatprep.subr.mxu0 %v256
  %279 = vmatpush1.msra.mxu0 %v255
  %280 = vmatprep.subr.mxu0 0.0
  %281 = vmatpush1.msra.mxu0 0.0
  %282 = vmatprep.subr.mxu0 0.0
  %283 = vmatpush1.msra.mxu0 0.0
  %284 = vmatprep.subr.mxu0 0.0
  %285 = vmatpush1.msra.mxu0 0.0
  %286 = vmatprep.subr.mxu0 0.0
  %287 = vmatpush1.msra.mxu0 0.0
  %288 = vmatprep.subr.mxu0 0.0
  %289 = vmatpush1.msra.mxu0 0.0
  %290 = vmatprep.subr.mxu0 0.0
  %291 = vmatpush1.msra.mxu0 0.0
  %292 = vmatprep.subr.mxu0 0.0
  %293 = vmatpush1.msra.mxu0 0.0
  %294 = vmatprep.subr.mxu0 0.0
  %295 = vmatpush1.msra.mxu0 0.0
  %296 = vmatprep.subr.mxu0 0.0
  %297 = vmatpush1.msra.mxu0 0.0
  %298 = vmatprep.subr.mxu0 0.0
  %299 = vmatpush1.msra.mxu0 0.0
  %300 = vmatprep.subr.mxu0 0.0
  %301 = vmatpush1.msra.mxu0 0.0
  %302 = vmatprep.subr.mxu0 0.0
  %303 = vmatpush1.msra.mxu0 0.0
  %304 = vmatprep.subr.mxu0 0.0
  %305 = vmatpush1.msra.mxu0 0.0
  %306 = vmatprep.subr.mxu0 0.0
  %307 = vmatpush1.msra.mxu0 0.0
  %308 = vmatprep.subr.mxu0 0.0
  %309 = vmatpush1.msra.mxu0 0.0
  %310 = vmatprep.subr.mxu0 0.0
  %311 = vmatpush1.msra.mxu0 0.0
  %312 = vmatprep.subr.mxu0 0.0
  %313 = vmatpush1.msra.mxu0 0.0
  %314 = vmatprep.subr.mxu0 0.0
  %315 = vmatpush1.msra.mxu0 0.0
  %316 = vmatprep.subr.mxu0 0.0
  %317 = vmatpush1.msra.mxu0 0.0
  %318 = vmatprep.subr.mxu0 0.0
  %319 = vmatpush1.msra.mxu0 0.0
  %320 = vmatprep.subr.mxu0 0.0
  %321 = vmatpush1.msra.mxu0 0.0
  %322 = vmatprep.subr.mxu0 0.0
  %323 = vmatpush1.msra.mxu0 0.0
  %324 = vmatprep.subr.mxu0 0.0
  %325 = vmatpush1.msra.mxu0 0.0
  %326 = vmatprep.mubr.f32.mxu0 0.0
  %327 = vmatmul.mubr.f32.gmra.mrb[0].mxu0 %v260
  %v328 = vpop.f32.mrb[0].mxu0
  %v329 = vadd.f32 0.0, %v328
  %v330 = vpop.f32.mrb[0].mxu0
  %v331 = vadd.f32 0.0, %v330
  %332 = vdwg.mxu0
  %333 = vmatprep.subr.mxu0 0.0
  %334 = vmatpush1.msra.mxu0 %v233
  %335 = vmatprep.subr.mxu0 0.0
  %336 = vmatpush1.msra.mxu0 %v236
  %337 = vmatprep.subr.mxu0 0.0
  %338 = vmatpush1.msra.mxu0 %v239
  %339 = vmatprep.subr.mxu0 0.0
  %340 = vmatpush1.msra.mxu0 %v242
  %341 = vmatprep.subr.mxu0 0.0
  %342 = vmatpush1.msra.mxu0 %v245
  %343 = vmatprep.subr.mxu0 0.0
  %344 = vmatpush1.msra.mxu0 %v248
  %345 = vmatprep.subr.mxu0 0.0
  %346 = vmatpush1.msra.mxu0 %v251
  %347 = vmatprep.subr.mxu0 0.0
  %348 = vmatpush1.msra.mxu0 %v254
  %349 = vmatprep.subr.mxu0 0.0
  %350 = vmatpush1.msra.mxu0 %v257
  %351 = vmatprep.subr.mxu0 0.0
  %352 = vmatpush1.msra.mxu0 0.0
  %353 = vmatprep.subr.mxu0 0.0
  %354 = vmatpush1.msra.mxu0 0.0
  %355 = vmatprep.subr.mxu0 0.0
  %356 = vmatpush1.msra.mxu0 0.0
  %357 = vmatprep.subr.mxu0 0.0
  %358 = vmatpush1.msra.mxu0 0.0
  %359 = vmatprep.subr.mxu0 0.0
  %360 = vmatpush1.msra.mxu0 0.0
  %361 = vmatprep.subr.mxu0 0.0
  %362 = vmatpush1.msra.mxu0 0.0
  %363 = vmatprep.subr.mxu0 0.0
  %364 = vmatpush1.msra.mxu0 0.0
  %365 = vmatprep.subr.mxu0 0.0
  %366 = vmatpush1.msra.mxu0 0.0
  %367 = vmatprep.subr.mxu0 0.0
  %368 = vmatpush1.msra.mxu0 0.0
  %369 = vmatprep.subr.mxu0 0.0
  %370 = vmatpush1.msra.mxu0 0.0
  %371 = vmatprep.subr.mxu0 0.0
  %372 = vmatpush1.msra.mxu0 0.0
  %373 = vmatprep.subr.mxu0 0.0
  %374 = vmatpush1.msra.mxu0 0.0
  %375 = vmatprep.subr.mxu0 0.0
  %376 = vmatpush1.msra.mxu0 0.0
  %377 = vmatprep.subr.mxu0 0.0
  %378 = vmatpush1.msra.mxu0 0.0
  %379 = vmatprep.subr.mxu0 0.0
  %380 = vmatpush1.msra.mxu0 0.0
  %381 = vmatprep.subr.mxu0 0.0
  %382 = vmatpush1.msra.mxu0 0.0
  %383 = vmatprep.subr.mxu0 0.0
  %384 = vmatpush1.msra.mxu0 0.0
  %385 = vmatprep.subr.mxu0 0.0
  %386 = vmatpush1.msra.mxu0 0.0
  %387 = vmatprep.subr.mxu0 0.0
  %388 = vmatpush1.msra.mxu0 0.0
  %389 = vmatprep.subr.mxu0 0.0
  %390 = vmatpush1.msra.mxu0 0.0
  %391 = vmatprep.subr.mxu0 0.0
  %392 = vmatpush1.msra.mxu0 0.0
  %393 = vmatprep.subr.mxu0 0.0
  %394 = vmatpush1.msra.mxu0 0.0
  %395 = vmatprep.subr.mxu0 0.0
  %396 = vmatpush1.msra.mxu0 0.0
  %397 = vmatprep.mubr.f32.mxu0 0.0
  %398 = vmatmul.mubr.f32.gmra.mrb[0].mxu0 %v260
  %v399 = vpop.f32.mrb[0].mxu0
  %v400 = vadd.f32 0.0, %v399
  %v401 = vpop.f32.mrb[0].mxu0
  %402 = vdwg.mxu0
  %v403 = vld [vmem:[%s2] sm:$0x7]
  %v405 = vlaneseq
  %v406 = vshrl.u32 %v405, 7
  %v407 = vsub.s32 0, %v406
  %v408 = vrot.slane %v403, %v407
  %v409 = vlaneseq
  %v410 = vshrl.u32 %v409, 7
  %v411 = vsub.s32 1, %v410
  %v412 = vrot.slane %v403, %v411
  %v413 = vlaneseq
  %v414 = vshrl.u32 %v413, 7
  %v415 = vsub.s32 2, %v414
  %v416 = vrot.slane %v403, %v415
  %v420 = vmul.f32 %v329, %v408
  %v421 = vmul.f32 %v331, %v412
  %v422 = vmul.f32 %v400, %v416
  %v423 = vadd.f32 %v420, %v421
  %v424 = vadd.f32 %v423, %v422
  %425 = vadd.xlane.f32.xlu0 %v424
  %v426 = vpop.xlane.xlu0 %425
  %v427 = vadd.f32 %v426, 0.0
  %v428 = vmul.f32 %v420, %v329
  %v429 = vmul.f32 %v421, %v331
  %v430 = vmul.f32 %v422, %v400
  %v431 = vadd.f32 %v428, %v429
  %v432 = vadd.f32 %v431, %v430
  %433 = vadd.xlane.f32.xlu0 %v432
  %v434 = vpop.xlane.xlu0 %433
  %v435 = vadd.f32 %v434, 0.0
  %s436 = scalar_lea.vmem %s0, 32
  %v437 = vld [vmem:[%s436] sm:$0xff]
  %v438 = vld [vmem:[%s436 + $0x8] sm:$0xff]
  %v439 = vld [vmem:[%s436 + $0x10] sm:$0xff]
  %440 = vst [vmem:[#allocation2] sm:$0xff] %v437
  %441 = vst [vmem:[#allocation2 + $0x8] sm:$0xff] %v438
  %442 = vst [vmem:[#allocation2 + $0x10] sm:$0xff] %v439
  %v443 = vld [vmem:[%s436] sm:$0xff]
  %v444 = vld [vmem:[%s436 + $0x8] sm:$0xff]
  %v445 = vld [vmem:[%s436 + $0x10] sm:$0xff]
  %v446 = vld [vmem:[%s436 + $0x18] sm:$0xff]
  %451 = vrot.lane.b32.xlu0 %v443, 127
  %v452 = vpop.permute.xlu0 %451
  %453 = vrot.lane.b32.xlu0 %v444, 127
  %v454 = vpop.permute.xlu0 %453
  %455 = vrot.lane.b32.xlu0 %v445, 127
  %v456 = vpop.permute.xlu0 %455
  %457 = vrot.lane.b32.xlu0 %v446, 127
  %v458 = vpop.permute.xlu0 %457
  %v459 = vsel %vm38, %v452, %v454
  %v460 = vsel %vm38, %v454, %v456
  %v461 = vsel %vm38, %v456, %v458
  %465 = vst [vmem:[#allocation2 + $0x18] sm:$0xff] %v459
  %466 = vst [vmem:[#allocation2 + $0x20] sm:$0xff] %v460
  %467 = vst [vmem:[#allocation2 + $0x28] sm:$0xff] %v461
  %v468 = vld [vmem:[%s436] sm:$0xff]
  %v469 = vld [vmem:[%s436 + $0x8] sm:$0xff]
  %v470 = vld [vmem:[%s436 + $0x10] sm:$0xff]
  %v471 = vld [vmem:[%s436 + $0x18] sm:$0xff]
  %476 = vrot.lane.b32.xlu0 %v468, 126
  %v477 = vpop.permute.xlu0 %476
  %478 = vrot.lane.b32.xlu0 %v469, 126
  %v479 = vpop.permute.xlu0 %478
  %480 = vrot.lane.b32.xlu0 %v470, 126
  %v481 = vpop.permute.xlu0 %480
  %482 = vrot.lane.b32.xlu0 %v471, 126
  %v483 = vpop.permute.xlu0 %482
  %v484 = vsel %vm64, %v477, %v479
  %v485 = vsel %vm64, %v479, %v481
  %v486 = vsel %vm64, %v481, %v483
  %490 = vst [vmem:[#allocation2 + $0x30] sm:$0xff] %v484
  %491 = vst [vmem:[#allocation2 + $0x38] sm:$0xff] %v485
  %492 = vst [vmem:[#allocation2 + $0x40] sm:$0xff] %v486
  %v493 = vld [vmem:[%s436] sm:$0xff]
  %v494 = vld [vmem:[%s436 + $0x8] sm:$0xff]
  %v495 = vld [vmem:[%s436 + $0x10] sm:$0xff]
  %v496 = vld [vmem:[%s436 + $0x18] sm:$0xff]
  %501 = vrot.lane.b32.xlu0 %v493, 110
  %v502 = vpop.permute.xlu0 %501
  %503 = vrot.lane.b32.xlu0 %v494, 110
  %v504 = vpop.permute.xlu0 %503
  %505 = vrot.lane.b32.xlu0 %v495, 110
  %v506 = vpop.permute.xlu0 %505
  %507 = vrot.lane.b32.xlu0 %v496, 110
  %v508 = vpop.permute.xlu0 %507
  %v509 = vsel %vm90, %v502, %v504
  %v510 = vsel %vm90, %v504, %v506
  %v511 = vsel %vm90, %v506, %v508
  %515 = vst [vmem:[#allocation2 + $0x48] sm:$0xff] %v509
  %516 = vst [vmem:[#allocation2 + $0x50] sm:$0xff] %v510
  %517 = vst [vmem:[#allocation2 + $0x58] sm:$0xff] %v511
  %v518 = vld [vmem:[%s436] sm:$0xff]
  %v519 = vld [vmem:[%s436 + $0x8] sm:$0xff]
  %v520 = vld [vmem:[%s436 + $0x10] sm:$0xff]
  %v521 = vld [vmem:[%s436 + $0x18] sm:$0xff]
  %526 = vrot.lane.b32.xlu0 %v518, 109
  %v527 = vpop.permute.xlu0 %526
  %528 = vrot.lane.b32.xlu0 %v519, 109
  %v529 = vpop.permute.xlu0 %528
  %530 = vrot.lane.b32.xlu0 %v520, 109
  %v531 = vpop.permute.xlu0 %530
  %532 = vrot.lane.b32.xlu0 %v521, 109
  %v533 = vpop.permute.xlu0 %532
  %v534 = vsel %vm116, %v527, %v529
  %v535 = vsel %vm116, %v529, %v531
  %v536 = vsel %vm116, %v531, %v533
  %540 = vst [vmem:[#allocation2 + $0x60] sm:$0xff] %v534
  %541 = vst [vmem:[#allocation2 + $0x68] sm:$0xff] %v535
  %542 = vst [vmem:[#allocation2 + $0x70] sm:$0xff] %v536
  %v543 = vld [vmem:[%s436] sm:$0xff]
  %v544 = vld [vmem:[%s436 + $0x8] sm:$0xff]
  %v545 = vld [vmem:[%s436 + $0x10] sm:$0xff]
  %v546 = vld [vmem:[%s436 + $0x18] sm:$0xff]
  %551 = vrot.lane.b32.xlu0 %v543, 108
  %v552 = vpop.permute.xlu0 %551
  %553 = vrot.lane.b32.xlu0 %v544, 108
  %v554 = vpop.permute.xlu0 %553
  %555 = vrot.lane.b32.xlu0 %v545, 108
  %v556 = vpop.permute.xlu0 %555
  %557 = vrot.lane.b32.xlu0 %v546, 108
  %v558 = vpop.permute.xlu0 %557
  %v559 = vsel %vm142, %v552, %v554
  %v560 = vsel %vm142, %v554, %v556
  %v561 = vsel %vm142, %v556, %v558
  %565 = vst [vmem:[#allocation2 + $0x78] sm:$0xff] %v559
  %566 = vst [vmem:[#allocation2 + $0x80] sm:$0xff] %v560
  %567 = vst [vmem:[#allocation2 + $0x88] sm:$0xff] %v561
  %v568 = vld [vmem:[%s436] sm:$0xff]
  %v569 = vld [vmem:[%s436 + $0x8] sm:$0xff]
  %v570 = vld [vmem:[%s436 + $0x10] sm:$0xff]
  %v571 = vld [vmem:[%s436 + $0x18] sm:$0xff]
  %576 = vrot.lane.b32.xlu0 %v568, 92
  %v577 = vpop.permute.xlu0 %576
  %578 = vrot.lane.b32.xlu0 %v569, 92
  %v579 = vpop.permute.xlu0 %578
  %580 = vrot.lane.b32.xlu0 %v570, 92
  %v581 = vpop.permute.xlu0 %580
  %582 = vrot.lane.b32.xlu0 %v571, 92
  %v583 = vpop.permute.xlu0 %582
  %v584 = vsel %vm168, %v577, %v579
  %v585 = vsel %vm168, %v579, %v581
  %v586 = vsel %vm168, %v581, %v583
  %590 = vst [vmem:[#allocation2 + $0x90] sm:$0xff] %v584
  %591 = vst [vmem:[#allocation2 + $0x98] sm:$0xff] %v585
  %592 = vst [vmem:[#allocation2 + $0xa0] sm:$0xff] %v586
  %v593 = vld [vmem:[%s436] sm:$0xff]
  %v594 = vld [vmem:[%s436 + $0x8] sm:$0xff]
  %v595 = vld [vmem:[%s436 + $0x10] sm:$0xff]
  %v596 = vld [vmem:[%s436 + $0x18] sm:$0xff]
  %601 = vrot.lane.b32.xlu0 %v593, 91
  %v602 = vpop.permute.xlu0 %601
  %603 = vrot.lane.b32.xlu0 %v594, 91
  %v604 = vpop.permute.xlu0 %603
  %605 = vrot.lane.b32.xlu0 %v595, 91
  %v606 = vpop.permute.xlu0 %605
  %607 = vrot.lane.b32.xlu0 %v596, 91
  %v608 = vpop.permute.xlu0 %607
  %v609 = vsel %vm194, %v602, %v604
  %v610 = vsel %vm194, %v604, %v606
  %v611 = vsel %vm194, %v606, %v608
  %615 = vst [vmem:[#allocation2 + $0xa8] sm:$0xff] %v609
  %616 = vst [vmem:[#allocation2 + $0xb0] sm:$0xff] %v610
  %617 = vst [vmem:[#allocation2 + $0xb8] sm:$0xff] %v611
  %v618 = vld [vmem:[%s436] sm:$0xff]
  %v619 = vld [vmem:[%s436 + $0x8] sm:$0xff]
  %v620 = vld [vmem:[%s436 + $0x10] sm:$0xff]
  %v621 = vld [vmem:[%s436 + $0x18] sm:$0xff]
  %626 = vrot.lane.b32.xlu0 %v618, 90
  %v627 = vpop.permute.xlu0 %626
  %628 = vrot.lane.b32.xlu0 %v619, 90
  %v629 = vpop.permute.xlu0 %628
  %630 = vrot.lane.b32.xlu0 %v620, 90
  %v631 = vpop.permute.xlu0 %630
  %632 = vrot.lane.b32.xlu0 %v621, 90
  %v633 = vpop.permute.xlu0 %632
  %v634 = vsel %vm220, %v627, %v629
  %v635 = vsel %vm220, %v629, %v631
  %v636 = vsel %vm220, %v631, %v633
  %640 = vst [vmem:[#allocation2 + $0xc0] sm:$0xff] %v634
  %641 = vst [vmem:[#allocation2 + $0xc8] sm:$0xff] %v635
  %642 = vst [vmem:[#allocation2 + $0xd0] sm:$0xff] %v636
  %v643 = vld [vmem:[%s1] sm:$0xff]
  %v644 = vld [vmem:[#allocation2] sm:$0xff]
  %v645 = vld [vmem:[#allocation2 + $0x8] sm:$0xff]
  %v646 = vld [vmem:[#allocation2 + $0x10] sm:$0xff]
  %v647 = vld [vmem:[#allocation2 + $0x18] sm:$0xff]
  %v648 = vld [vmem:[#allocation2 + $0x20] sm:$0xff]
  %v649 = vld [vmem:[#allocation2 + $0x28] sm:$0xff]
  %v650 = vld [vmem:[#allocation2 + $0x30] sm:$0xff]
  %v651 = vld [vmem:[#allocation2 + $0x38] sm:$0xff]
  %v652 = vld [vmem:[#allocation2 + $0x40] sm:$0xff]
  %v653 = vld [vmem:[#allocation2 + $0x48] sm:$0xff]
  %v654 = vld [vmem:[#allocation2 + $0x50] sm:$0xff]
  %v655 = vld [vmem:[#allocation2 + $0x58] sm:$0xff]
  %v656 = vld [vmem:[#allocation2 + $0x60] sm:$0xff]
  %v657 = vld [vmem:[#allocation2 + $0x68] sm:$0xff]
  %v658 = vld [vmem:[#allocation2 + $0x70] sm:$0xff]
  %v659 = vld [vmem:[#allocation2 + $0x78] sm:$0xff]
  %v660 = vld [vmem:[#allocation2 + $0x80] sm:$0xff]
  %v661 = vld [vmem:[#allocation2 + $0x88] sm:$0xff]
  %v662 = vld [vmem:[#allocation2 + $0x90] sm:$0xff]
  %v663 = vld [vmem:[#allocation2 + $0x98] sm:$0xff]
  %v664 = vld [vmem:[#allocation2 + $0xa0] sm:$0xff]
  %v665 = vld [vmem:[#allocation2 + $0xa8] sm:$0xff]
  %v666 = vld [vmem:[#allocation2 + $0xb0] sm:$0xff]
  %v667 = vld [vmem:[#allocation2 + $0xb8] sm:$0xff]
  %v668 = vld [vmem:[#allocation2 + $0xc0] sm:$0xff]
  %v669 = vld [vmem:[#allocation2 + $0xc8] sm:$0xff]
  %v670 = vld [vmem:[#allocation2 + $0xd0] sm:$0xff]
  %v672 = vsel %vm258, %v643, 0
  %674 = vmatprep.subr.mxu0 %v645
  %675 = vmatpush1.msra.mxu0 %v644
  %676 = vmatprep.subr.mxu0 %v648
  %677 = vmatpush1.msra.mxu0 %v647
  %678 = vmatprep.subr.mxu0 %v651
  %679 = vmatpush1.msra.mxu0 %v650
  %680 = vmatprep.subr.mxu0 %v654
  %681 = vmatpush1.msra.mxu0 %v653
  %682 = vmatprep.subr.mxu0 %v657
  %683 = vmatpush1.msra.mxu0 %v656
  %684 = vmatprep.subr.mxu0 %v660
  %685 = vmatpush1.msra.mxu0 %v659
  %686 = vmatprep.subr.mxu0 %v663
  %687 = vmatpush1.msra.mxu0 %v662
  %688 = vmatprep.subr.mxu0 %v666
  %689 = vmatpush1.msra.mxu0 %v665
  %690 = vmatprep.subr.mxu0 %v669
  %691 = vmatpush1.msra.mxu0 %v668
  %692 = vmatprep.subr.mxu0 0.0
  %693 = vmatpush1.msra.mxu0 0.0
  %694 = vmatprep.subr.mxu0 0.0
  %695 = vmatpush1.msra.mxu0 0.0
  %696 = vmatprep.subr.mxu0 0.0
  %697 = vmatpush1.msra.mxu0 0.0
  %698 = vmatprep.subr.mxu0 0.0
  %699 = vmatpush1.msra.mxu0 0.0
  %700 = vmatprep.subr.mxu0 0.0
  %701 = vmatpush1.msra.mxu0 0.0
  %702 = vmatprep.subr.mxu0 0.0
  %703 = vmatpush1.msra.mxu0 0.0
  %704 = vmatprep.subr.mxu0 0.0
  %705 = vmatpush1.msra.mxu0 0.0
  %706 = vmatprep.subr.mxu0 0.0
  %707 = vmatpush1.msra.mxu0 0.0
  %708 = vmatprep.subr.mxu0 0.0
  %709 = vmatpush1.msra.mxu0 0.0
  %710 = vmatprep.subr.mxu0 0.0
  %711 = vmatpush1.msra.mxu0 0.0
  %712 = vmatprep.subr.mxu0 0.0
  %713 = vmatpush1.msra.mxu0 0.0
  %714 = vmatprep.subr.mxu0 0.0
  %715 = vmatpush1.msra.mxu0 0.0
  %716 = vmatprep.subr.mxu0 0.0
  %717 = vmatpush1.msra.mxu0 0.0
  %718 = vmatprep.subr.mxu0 0.0
  %719 = vmatpush1.msra.mxu0 0.0
  %720 = vmatprep.subr.mxu0 0.0
  %721 = vmatpush1.msra.mxu0 0.0
  %722 = vmatprep.subr.mxu0 0.0
  %723 = vmatpush1.msra.mxu0 0.0
  %724 = vmatprep.subr.mxu0 0.0
  %725 = vmatpush1.msra.mxu0 0.0
  %726 = vmatprep.subr.mxu0 0.0
  %727 = vmatpush1.msra.mxu0 0.0
  %728 = vmatprep.subr.mxu0 0.0
  %729 = vmatpush1.msra.mxu0 0.0
  %730 = vmatprep.subr.mxu0 0.0
  %731 = vmatpush1.msra.mxu0 0.0
  %732 = vmatprep.subr.mxu0 0.0
  %733 = vmatpush1.msra.mxu0 0.0
  %734 = vmatprep.subr.mxu0 0.0
  %735 = vmatpush1.msra.mxu0 0.0
  %736 = vmatprep.subr.mxu0 0.0
  %737 = vmatpush1.msra.mxu0 0.0
  %738 = vmatprep.mubr.f32.mxu0 0.0
  %739 = vmatmul.mubr.f32.gmra.mrb[0].mxu0 %v672
  %v740 = vpop.f32.mrb[0].mxu0
  %v741 = vadd.f32 0.0, %v740
  %v742 = vpop.f32.mrb[0].mxu0
  %v743 = vadd.f32 0.0, %v742
  %744 = vdwg.mxu0
  %745 = vmatprep.subr.mxu0 0.0
  %746 = vmatpush1.msra.mxu0 %v646
  %747 = vmatprep.subr.mxu0 0.0
  %748 = vmatpush1.msra.mxu0 %v649
  %749 = vmatprep.subr.mxu0 0.0
  %750 = vmatpush1.msra.mxu0 %v652
  %751 = vmatprep.subr.mxu0 0.0
  %752 = vmatpush1.msra.mxu0 %v655
  %753 = vmatprep.subr.mxu0 0.0
  %754 = vmatpush1.msra.mxu0 %v658
  %755 = vmatprep.subr.mxu0 0.0
  %756 = vmatpush1.msra.mxu0 %v661
  %757 = vmatprep.subr.mxu0 0.0
  %758 = vmatpush1.msra.mxu0 %v664
  %759 = vmatprep.subr.mxu0 0.0
  %760 = vmatpush1.msra.mxu0 %v667
  %761 = vmatprep.subr.mxu0 0.0
  %762 = vmatpush1.msra.mxu0 %v670
  %763 = vmatprep.subr.mxu0 0.0
  %764 = vmatpush1.msra.mxu0 0.0
  %765 = vmatprep.subr.mxu0 0.0
  %766 = vmatpush1.msra.mxu0 0.0
  %767 = vmatprep.subr.mxu0 0.0
  %768 = vmatpush1.msra.mxu0 0.0
  %769 = vmatprep.subr.mxu0 0.0
  %770 = vmatpush1.msra.mxu0 0.0
  %771 = vmatprep.subr.mxu0 0.0
  %772 = vmatpush1.msra.mxu0 0.0
  %773 = vmatprep.subr.mxu0 0.0
  %774 = vmatpush1.msra.mxu0 0.0
  %775 = vmatprep.subr.mxu0 0.0
  %776 = vmatpush1.msra.mxu0 0.0
  %777 = vmatprep.subr.mxu0 0.0
  %778 = vmatpush1.msra.mxu0 0.0
  %779 = vmatprep.subr.mxu0 0.0
  %780 = vmatpush1.msra.mxu0 0.0
  %781 = vmatprep.subr.mxu0 0.0
  %782 = vmatpush1.msra.mxu0 0.0
  %783 = vmatprep.subr.mxu0 0.0
  %784 = vmatpush1.msra.mxu0 0.0
  %785 = vmatprep.subr.mxu0 0.0
  %786 = vmatpush1.msra.mxu0 0.0
  %787 = vmatprep.subr.mxu0 0.0
  %788 = vmatpush1.msra.mxu0 0.0
  %789 = vmatprep.subr.mxu0 0.0
  %790 = vmatpush1.msra.mxu0 0.0
  %791 = vmatprep.subr.mxu0 0.0
  %792 = vmatpush1.msra.mxu0 0.0
  %793 = vmatprep.subr.mxu0 0.0
  %794 = vmatpush1.msra.mxu0 0.0
  %795 = vmatprep.subr.mxu0 0.0
  %796 = vmatpush1.msra.mxu0 0.0
  %797 = vmatprep.subr.mxu0 0.0
  %798 = vmatpush1.msra.mxu0 0.0
  %799 = vmatprep.subr.mxu0 0.0
  %800 = vmatpush1.msra.mxu0 0.0
  %801 = vmatprep.subr.mxu0 0.0
  %802 = vmatpush1.msra.mxu0 0.0
  %803 = vmatprep.subr.mxu0 0.0
  %804 = vmatpush1.msra.mxu0 0.0
  %805 = vmatprep.subr.mxu0 0.0
  %806 = vmatpush1.msra.mxu0 0.0
  %807 = vmatprep.subr.mxu0 0.0
  %808 = vmatpush1.msra.mxu0 0.0
  %809 = vmatprep.mubr.f32.mxu0 0.0
  %810 = vmatmul.mubr.f32.gmra.mrb[0].mxu0 %v672
  %v811 = vpop.f32.mrb[0].mxu0
  %v812 = vadd.f32 0.0, %v811
  %v813 = vpop.f32.mrb[0].mxu0
  %814 = vdwg.mxu0
  %v815 = vld [vmem:[%s2] sm:$0x7]
  %v817 = vlaneseq
  %v818 = vshrl.u32 %v817, 7
  %v819 = vsub.s32 0, %v818
  %v820 = vrot.slane %v815, %v819
  %v821 = vlaneseq
  %v822 = vshrl.u32 %v821, 7
  %v823 = vsub.s32 1, %v822
  %v824 = vrot.slane %v815, %v823
  %v825 = vlaneseq
  %v826 = vshrl.u32 %v825, 7
  %v827 = vsub.s32 2, %v826
  %v828 = vrot.slane %v815, %v827
  %v832 = vmul.f32 %v741, %v820
  %v833 = vmul.f32 %v743, %v824
  %v834 = vmul.f32 %v812, %v828
  %v835 = vadd.f32 %v832, %v833
  %v836 = vadd.f32 %v835, %v834
  %837 = vadd.xlane.f32.xlu0 %v836
  %v838 = vpop.xlane.xlu0 %837
  %v839 = vadd.f32 %v427, %v838
  %v840 = vmul.f32 %v832, %v741
  %v841 = vmul.f32 %v833, %v743
  %v842 = vmul.f32 %v834, %v812
  %v843 = vadd.f32 %v840, %v841
  %v844 = vadd.f32 %v843, %v842
  %845 = vadd.xlane.f32.xlu0 %v844
  %v846 = vpop.xlane.xlu0 %845
  %v847 = vadd.f32 %v435, %v846
  %vm848 = vcmask 7168
  %849 = vst.msk [vmem:[%s3] sm:$0xff] %vm848, %v839
  %850 = vst.msk [vmem:[%s4] sm:$0xff] %vm848, %v847
  // Predicated region
  $region14: #{cnn_select_forward.2} parent=0 // pred_check
    _
  $region15: #{cnn_select_forward.2} parent=0 // pred_check_branch
    %852 = sbr.rel (0) target = $region17
  $region16: #{cnn_select_forward.2} parent=0 // pred_region
    _
  $region17: #{cnn_select_forward.2} parent=0 // pred_fallthru
    _
  // Predicated region
  $region18: #{cnn_select_forward.2} parent=0 // pred_check
    _
  $region19: #{cnn_select_forward.2} parent=0 // pred_check_branch
    %854 = sbr.rel (0) target = $region21
  $region20: #{cnn_select_forward.2} parent=0 // pred_region
    _
  $region21: #{cnn_select_forward.2} parent=0 // pred_fallthru
    _
  // Predicated region
  $region22: #{cnn_select_forward.2} parent=0 // pred_check
    _
  $region23: #{cnn_select_forward.2} parent=0 // pred_check_branch
    %856 = sbr.rel (0) target = $region25
  $region24: #{cnn_select_forward.2} parent=0 // pred_region
    _
  $region25: #{cnn_select_forward.2} parent=0 // pred_fallthru
    _
  // Predicated region
  $region26: #{cnn_select_forward.2} parent=0 // pred_check
    _
  $region27: #{cnn_select_forward.2} parent=0 // pred_check_branch
    %858 = sbr.rel (0) target = $region29
  $region28: #{cnn_select_forward.2} parent=0 // pred_region
    _
  $region29: #{cnn_select_forward.2} parent=0 // pred_fallthru
    _

</llo_original>
